<compile_context>
chip_gen: v5e
topology: v5e:2x2
jax: 0.10.0
libtpu: 0.0.40
codegen_flags: <defaults>
</compile_context>

<pallas_src>
import functools

import jax
import jax.numpy as jnp
from jax import lax
from jax.experimental import pallas as pl
from jax.experimental.pallas import tpu as pltpu


def _round_up(x, m):
    return ((x + m - 1) // m) * m


# ----------------------------------------------------------------------------
# Kernel 1: lane-dense LeakyReLU(0.2)
# ----------------------------------------------------------------------------
def _leaky_relu_kernel(x_ref, o_ref):
    x = x_ref[...]
    o_ref[...] = jnp.where(x >= 0, x, jnp.float32(0.2) * x)


def leaky_relu_pallas(x):
    """Elementwise LeakyReLU; layout-agnostic, so run it on a (rows, 128) lane-dense slab
    with a parallel row grid (unmasked full-width stores, pipelined tiles)."""
    shape, dtype = x.shape, x.dtype
    lane = 128
    n_elem = x.size
    rows0 = (n_elem + lane - 1) // lane
    tr = min(512, _round_up(rows0, 8))          # row tile (<= 512*128 f32 = 256 KiB)
    rows = _round_up(rows0, tr)
    flat = x.reshape(n_elem)
    if rows * lane != n_elem:
        flat = jnp.pad(flat, (0, rows * lane - n_elem))
    x2 = flat.reshape(rows, lane)
    out = pl.pallas_call(
        _leaky_relu_kernel,
        out_shape=jax.ShapeDtypeStruct((rows, lane), dtype),
        grid_spec=pltpu.PrefetchScalarGridSpec(
            num_scalar_prefetch=0,
            grid=(rows // tr,),
            in_specs=[pl.BlockSpec((tr, lane), lambda i: (i, 0))],
            out_specs=pl.BlockSpec((tr, lane), lambda i: (i, 0)),
        ),
        compiler_params=pltpu.CompilerParams(dimension_semantics=("parallel",)),
    )(x2)
    out = out.reshape(rows * lane)
    if rows * lane != n_elem:
        out = out[:n_elem]
    return out.reshape(shape)


# ----------------------------------------------------------------------------
# Kernel 2: down-conv GEMM (M grid "parallel", K grid "arbitrary", fused ReLU epilogue)
# ----------------------------------------------------------------------------
def _gemm_kernel(a_ref, b_ref, o_ref, acc_ref, *, activation):
    @pl.when(pl.program_id(1) == 0)
    def _():
        acc_ref[...] = jnp.zeros_like(acc_ref)

    acc_ref[...] += jnp.dot(a_ref[...], b_ref[...], preferred_element_type=jnp.float32)

    @pl.when(pl.program_id(1) == pl.num_programs(1) - 1)
    def _():
        acc = acc_ref[...]
        if activation == "relu":
            acc = jnp.maximum(acc, 0.0)           # epilogue stays f32 on the VPU (v5e-safe)
        o_ref[...] = acc.astype(o_ref.dtype)      # cast (e.g. to bf16) only at the store


def matmul_act(a, b, activation=None, out_dtype=jnp.float32, tm_max=512, tk_max=512):
    """(M, K) @ (K, N) -> (M, N).  M tiled (parallel), K tiled (arbitrary, f32 VMEM accumulator).
    N kept whole (conv channel counts fit comfortably); padded M rows are zero => zero outputs."""
    m, k = a.shape
    k2, n = b.shape
    assert k == k2
    tm = min(tm_max, _round_up(m, 8))
    mp = _round_up(m, tm)
    if k <= tk_max:
        tk, kp = k, k
    else:
        tk = tk_max
        kp = _round_up(k, tk)
    if mp != m or kp != k:
        a = jnp.pad(a, ((0, mp - m), (0, kp - k)))
    if kp != k:
        b = jnp.pad(b, ((0, kp - k), (0, 0)))

    out = pl.pallas_call(
        functools.partial(_gemm_kernel, activation=activation),
        out_shape=jax.ShapeDtypeStruct((mp, n), out_dtype),
        grid_spec=pltpu.PrefetchScalarGridSpec(
            num_scalar_prefetch=0,
            grid=(mp // tm, kp // tk),
            in_specs=[pl.BlockSpec((tm, tk), lambda i, kk: (i, kk)),
                      pl.BlockSpec((tk, n), lambda i, kk: (kk, 0))],
            out_specs=pl.BlockSpec((tm, n), lambda i, kk: (i, 0)),
            scratch_shapes=[pltpu.VMEM((tm, n), jnp.float32)],
        ),
        compiler_params=pltpu.CompilerParams(
            dimension_semantics=("parallel", "arbitrary")),
    )(a, b)
    return out[:m] if mp != m else out


# ----------------------------------------------------------------------------
# Kernel 3: up-conv phase GEMMs with BatchNorm statistics fused into the epilogue
# ----------------------------------------------------------------------------
def _up_gemm_stats_kernel(a_ref, b_ref, o_ref, sum_ref, ssq_ref):
    @pl.when((pl.program_id(0) == 0) & (pl.program_id(1) == 0))
    def _():
        sum_ref[...] = jnp.zeros_like(sum_ref)
        ssq_ref[...] = jnp.zeros_like(ssq_ref)

    acc = jnp.dot(a_ref[...], b_ref[...], preferred_element_type=jnp.float32)
    o_ref[...] = acc.astype(o_ref.dtype)
    # Per-channel batch-stat partials (zero-padded rows are all-zero => no bias).
    sum_ref[...] += jnp.sum(acc, axis=0, keepdims=True)
    ssq_ref[...] += jnp.sum(acc * acc, axis=0, keepdims=True)


def up_phase_gemm_with_stats(a_phases, b_phases, tm_max=512):
    """a_phases: (4, M, K) bf16, b_phases: (4, K, C) bf16 -> u: (4, M, C) f32,
    plus per-channel sum and sum-of-squares over all 4*M rows (BN batch stats)."""
    p, m, k = a_phases.shape
    _, _, c = b_phases.shape
    tm = min(tm_max, _round_up(m, 8))
    mp = _round_up(m, tm)
    if mp != m:
        a_phases = jnp.pad(a_phases, ((0, 0), (0, mp - m), (0, 0)))

    u, s, ss = pl.pallas_call(
        _up_gemm_stats_kernel,
        out_shape=(jax.ShapeDtypeStruct((p, mp, c), jnp.float32),
                   jax.ShapeDtypeStruct((1, c), jnp.float32),
                   jax.ShapeDtypeStruct((1, c), jnp.float32)),
        grid_spec=pltpu.PrefetchScalarGridSpec(
            num_scalar_prefetch=0,
            grid=(p, mp // tm),
            in_specs=[pl.BlockSpec((None, tm, k), lambda ph, i: (ph, i, 0)),
                      pl.BlockSpec((None, k, c), lambda ph, i: (ph, 0, 0))],
            out_specs=(pl.BlockSpec((None, tm, c), lambda ph, i: (ph, i, 0)),
                       pl.BlockSpec((1, c), lambda ph, i: (0, 0)),
                       pl.BlockSpec((1, c), lambda ph, i: (0, 0))),
        ),
        # stat outputs are resident accumulators across the whole grid => both axes arbitrary
        compiler_params=pltpu.CompilerParams(
            dimension_semantics=("arbitrary", "arbitrary")),
    )(a_phases, b_phases)
    if mp != m:
        u = u[:, :m]
    return u, s, ss


# ----------------------------------------------------------------------------
# Kernel 4: BatchNorm normalize (tiled per-channel scale + shift)
# ----------------------------------------------------------------------------
def _scale_shift_kernel(u_ref, scale_ref, shift_ref, o_ref):
    o_ref[...] = u_ref[...] * scale_ref[...] + shift_ref[...]


def scale_shift_pallas(u, scale, shift, tm_max=512):
    p, m, c = u.shape
    tm = min(tm_max, _round_up(m, 8))
    mp = _round_up(m, tm)
    if mp != m:
        u = jnp.pad(u, ((0, 0), (0, mp - m), (0, 0)))
    out = pl.pallas_call(
        _scale_shift_kernel,
        out_shape=jax.ShapeDtypeStruct((p, mp, c), u.dtype),
        grid_spec=pltpu.PrefetchScalarGridSpec(
            num_scalar_prefetch=0,
            grid=(p, mp // tm),
            in_specs=[pl.BlockSpec((None, tm, c), lambda ph, i: (ph, i, 0)),
                      pl.BlockSpec((1, c), lambda ph, i: (0, 0)),
                      pl.BlockSpec((1, c), lambda ph, i: (0, 0))],
            out_specs=pl.BlockSpec((None, tm, c), lambda ph, i: (ph, i, 0)),
        ),
        compiler_params=pltpu.CompilerParams(
            dimension_semantics=("parallel", "parallel")),
    )(u, scale, shift)
    return out[:, :m] if mp != m else out


# ----------------------------------------------------------------------------
# Plain-JAX glue: im2col patch extraction (pure layout work)
# ----------------------------------------------------------------------------
def _extract_patches(x_nhwc, k, stride, pad):
    """im2col: (N*Ho*Wo, k*k*C), flattening order (kh, kw, ci)."""
    if pad:
        x_nhwc = jnp.pad(x_nhwc, ((0, 0), (pad, pad), (pad, pad), (0, 0)))
    n, hp, wp, c = x_nhwc.shape
    ho = (hp - k) // stride + 1
    wo = (wp - k) // stride + 1
    cols = []
    for kh in range(k):
        for kw in range(k):
            cols.append(x_nhwc[:, kh:kh + stride * (ho - 1) + 1:stride,
                                  kw:kw + stride * (wo - 1) + 1:stride, :])
    patches = jnp.stack(cols, axis=3)                    # (N, Ho, Wo, k*k, C)
    return patches.reshape(n * ho * wo, k * k * c), (n, ho, wo)


# ----------------------------------------------------------------------------
# Module forward (innermost UnetSkipConnectionBlock)
# ----------------------------------------------------------------------------
def init_params(key, input_nc, inner_nc, outer_nc, k=4):
    k1, k2 = jax.random.split(key)
    return {
        # Conv2d(input_nc, inner_nc, 4, 2, 1, bias=False): weight (Cout, Cin, kH, kW)
        "w_down": 0.02 * jax.random.normal(k1, (inner_nc, input_nc, k, k), jnp.float32),
        # ConvTranspose2d(inner_nc, outer_nc, 4, 2, 1, bias=False): weight (Cin, Cout, kH, kW)
        "w_up": 0.02 * jax.random.normal(k2, (inner_nc, outer_nc, k, k), jnp.float32),
        # BatchNorm2d(outer_nc) default init
        "bn_gamma": jnp.ones((1, outer_nc), jnp.float32),
        "bn_beta": jnp.zeros((1, outer_nc), jnp.float32),
    }


def unet_innermost_forward(x_nchw, params):
    w_down, w_up = params["w_down"], params["w_up"]
    gamma, beta = params["bn_gamma"], params["bn_beta"]
    n, cin, h, w = x_nchw.shape
    inner_nc = w_down.shape[0]
    outer_nc = w_up.shape[1]
    k = 4

    x_nhwc = jnp.transpose(x_nchw, (0, 2, 3, 1))

    # down: LeakyReLU(0.2)  (inplace in PyTorch => the skip branch also sees it)
    y1_nhwc = leaky_relu_pallas(x_nhwc)                                   # f32 (skip stays f32)

    # down: Conv2d(4, s=2, p=1, bias=False) as im2col GEMM; ReLU fused; bf16 operands, bf16 h.
    patches, (_, ho, wo) = _extract_patches(y1_nhwc.astype(jnp.bfloat16), k, stride=2, pad=1)
    wd2d = jnp.transpose(w_down, (2, 3, 1, 0)).reshape(k * k * cin, inner_nc).astype(jnp.bfloat16)
    h_flat = matmul_act(patches, wd2d, activation="relu", out_dtype=jnp.bfloat16)
    h_nhwc = h_flat.reshape(n, ho, wo, inner_nc)

    # up: ConvTranspose2d(4, s=2, p=1, bias=False) as 4 phase GEMMs (no zero-dilation work).
    # out[2Y+ry, 2X+rx] = sum_{a,b in {0,1}} h_pad[Y+ry+a, X+rx+b] . w_up[:, :, KTAP[ry][a], KTAP[rx][b]]
    h_pad = jnp.pad(h_nhwc, ((0, 0), (1, 1), (1, 1), (0, 0)))
    ktap = ((3, 1), (2, 0))
    a_list, b_list = [], []
    for ry in range(2):
        for rx in range(2):
            cols, wrows = [], []
            for a in range(2):
                for b in range(2):
                    cols.append(h_pad[:, ry + a:ry + a + ho, rx + b:rx + b + wo, :])
                    wrows.append(w_up[:, :, ktap[ry][a], ktap[rx][b]])     # (Cin, Cout)
            a_list.append(jnp.stack(cols, axis=3).reshape(n * ho * wo, 4 * inner_nc))
            b_list.append(jnp.stack(wrows, axis=0).reshape(4 * inner_nc, outer_nc))
    a_phases = jnp.stack(a_list, axis=0)                                   # (4, M, 4*inner) bf16
    b_phases = jnp.stack(b_list, axis=0).astype(jnp.bfloat16)              # (4, 4*inner, outer)
    u_phases, u_sum, u_ssq = up_phase_gemm_with_stats(a_phases, b_phases)  # f32 + fused BN stats

    # up: BatchNorm2d (training-mode batch statistics, biased variance) from the fused sums.
    count = jnp.float32(4 * n * ho * wo)                                   # real rows only
    mean = u_sum / count
    var = jnp.maximum(u_ssq / count - mean * mean, 0.0)
    inv = lax.rsqrt(var + jnp.float32(1e-5))
    scale = gamma * inv
    shift = beta - mean * scale
    u_phases = scale_shift_pallas(u_phases, scale, shift)

    # interleave the 4 phases back to NHWC: out[n, 2Y+ry, 2X+rx, c] = phase[ry, rx][n, Y, X, c]
    u_nhwc = (u_phases.reshape(2, 2, n, ho, wo, outer_nc)
              .transpose(2, 3, 0, 4, 1, 5)
              .reshape(n, 2 * ho, 2 * wo, outer_nc))

    # skip connection: torch.cat([x, model(x)], 1)  (x already LeakyReLU'd, see header note)
    out_nhwc = jnp.concatenate([y1_nhwc, u_nhwc], axis=-1)
    return jnp.transpose(out_nhwc, (0, 3, 1, 2))


# ----------------------------------------------------------------------------
# Pure-JAX reference (lax convolutions) for validation
# ----------------------------------------------------------------------------
def reference_forward(x_nchw, params, quantize_bf16=False):
    w_down, w_up = params["w_down"], params["w_up"]
    gamma = params["bn_gamma"].reshape(1, -1, 1, 1)
    beta = params["bn_beta"].reshape(1, -1, 1, 1)
    dn = ("NCHW", "OIHW", "NCHW")
    prec = lax.Precision.HIGHEST
    q = (lambda t: t.astype(jnp.bfloat16).astype(jnp.float32)) if quantize_bf16 else (lambda t: t)

    y1 = jnp.where(x_nchw >= 0, x_nchw, 0.2 * x_nchw)
    h = lax.conv_general_dilated(q(y1), q(w_down), (2, 2), ((1, 1), (1, 1)),
                                 dimension_numbers=dn, precision=prec)
    h = jnp.maximum(h, 0.0)
    h = q(h)
    w_eq = jnp.transpose(jnp.flip(w_up, (2, 3)), (1, 0, 2, 3))     # (Cout, Cin, kH, kW)
    u = lax.conv_general_dilated(h, q(w_eq), (1, 1), ((2, 2), (2, 2)),
                                 lhs_dilation=(2, 2), dimension_numbers=dn, precision=prec)
    mean = u.mean(axis=(0, 2, 3), keepdims=True)
    var = jnp.square(u - mean).mean(axis=(0, 2, 3), keepdims=True)
    u = (u - mean) * lax.rsqrt(var + 1e-5) * gamma + beta
    return jnp.concatenate([y1, u], axis=1)


# ----------------------------------------------------------------------------
if __name__ == "__main__":
    # small shapes: batch=2, input_nc=outer_nc=4, inner_nc=8, spatial 16x16
    N, input_nc, inner_nc, outer_nc, H, W = 2, 4, 8, 4, 16, 16

    key = jax.random.PRNGKey(0)
    kx, kp = jax.random.split(key)
    x = jax.random.normal(kx, (N, input_nc, H, W), jnp.float32)
    params = init_params(kp, input_nc, inner_nc, outer_nc)

    out = jax.jit(unet_innermost_forward)(x, params)
    out = jax.block_until_ready(out)
    assert out.shape == (N, input_nc + outer_nc, H, W), out.shape

    # Strong structural check: same bf16 operand quantization, convs via lax (f32 accumulation).
    ref_q = reference_forward(x, params, quantize_bf16=True)
    err_q = float(jnp.max(jnp.abs(out - ref_q)))
    assert err_q < 5e-3, err_q
    # Loose sanity check vs the pure-f32 reference (only bf16 GEMM-operand drift expected).
    ref_f = reference_forward(x, params, quantize_bf16=False)
    err_f = float(jnp.max(jnp.abs(out - ref_f)))
    assert err_f < 1e-1, err_f

    print("KERNEL_OK")
</pallas_src>

<mosaic_0001>
module attributes {stable_mosaic.version = 11 : i64} {
  func.func @_leaky_relu_kernel(%arg0: i32, %arg1: memref<16x128xf32, #tpu.memory_space<vmem>>, %arg2: memref<16x128xf32, #tpu.memory_space<vmem>>) attributes {dimension_semantics = [#tpu.dimension_semantics<parallel>], iteration_bounds = array<i64: 1>, scalar_prefetch = 0 : i64, scratch_operands = 0 : i64, tpu.core_type = #tpu.core_type<tc>, window_params = [{transform_indices = @transform_0, window_bounds = array<i64: 16, 128>}, {transform_indices = @transform_1, window_bounds = array<i64: 16, 128>}]} {
    %c0 = arith.constant 0 : index
    %c0_0 = arith.constant 0 : index
    %0 = vector.load %arg1[%c0, %c0_0] : memref<16x128xf32, #tpu.memory_space<vmem>>, vector<16x128xf32>
    %cst = arith.constant 0.000000e+00 : f32
    %1 = vector.broadcast %cst : f32 to vector<16x128xf32>
    %2 = arith.cmpf oge, %0, %1 : vector<16x128xf32>
    %cst_1 = arith.constant 2.000000e-01 : f32
    %3 = vector.broadcast %cst_1 : f32 to vector<16x128xf32>
    %4 = arith.mulf %3, %0 : vector<16x128xf32>
    %5 = arith.select %2, %0, %4 : vector<16x128xi1>, vector<16x128xf32>
    %c0_2 = arith.constant 0 : index
    %c0_3 = arith.constant 0 : index
    %6 = vector.load %arg2[%c0_2, %c0_3] : memref<16x128xf32, #tpu.memory_space<vmem>>, vector<16x128xf32>
    tpu.vector_store %arg2[%c0_2, %c0_3], %5 {strides = array<i32>} : memref<16x128xf32, #tpu.memory_space<vmem>>, vector<16x128xf32>,
    return
  }
  func.func @transform_0(%arg0: i32) -> (i32, i32) {
    %c0_i32 = arith.constant 0 : i32
    %c0_i32_0 = arith.constant 0 : i32
    return %arg0, %c0_i32 : i32, i32
  }
  func.func @transform_1(%arg0: i32) -> (i32, i32) {
    %c0_i32 = arith.constant 0 : i32
    %c0_i32_0 = arith.constant 0 : i32
    return %arg0, %c0_i32 : i32, i32
  }
}

module attributes {stable_mosaic.version = 11 : i64} {
  func.func @_gemm_kernel(%arg0: i32, %arg1: i32, %arg2: memref<128x64xbf16, #tpu.memory_space<vmem>>, %arg3: memref<64x8xbf16, #tpu.memory_space<vmem>>, %arg4: memref<128x8xbf16, #tpu.memory_space<vmem>>, %arg5: memref<128x8xf32, #tpu.memory_space<vmem>>) attributes {dimension_semantics = [#tpu.dimension_semantics<parallel>, #tpu.dimension_semantics<arbitrary>], iteration_bounds = array<i64: 1, 1>, scalar_prefetch = 0 : i64, scratch_operands = 1 : i64, tpu.core_type = #tpu.core_type<tc>, window_params = [{transform_indices = @transform_0, window_bounds = array<i64: 128, 64>}, {transform_indices = @transform_1, window_bounds = array<i64: 64, 8>}, {transform_indices = @transform_2, window_bounds = array<i64: 128, 8>}]} {
    %c0_i32 = arith.constant 0 : i32
    %0 = arith.cmpi eq, %arg1, %c0_i32 : i32
    %1 = arith.extui %0 : i1 to i32
    %c0_i32_0 = arith.constant 0 : i32
    %2 = arith.cmpi ne, %1, %c0_i32_0 : i32
    scf.if %2 {
      %cst_10 = arith.constant 0.000000e+00 : f32
      %12 = vector.broadcast %cst_10 : f32 to vector<128x8xf32>
      %c0_11 = arith.constant 0 : index
      %c0_12 = arith.constant 0 : index
      %13 = vector.load %arg5[%c0_11, %c0_12] : memref<128x8xf32, #tpu.memory_space<vmem>>, vector<128x8xf32>
      tpu.vector_store %arg5[%c0_11, %c0_12], %12 {strides = array<i32>} : memref<128x8xf32, #tpu.memory_space<vmem>>, vector<128x8xf32>,
    } else {
    }
    %c0 = arith.constant 0 : index
    %c0_1 = arith.constant 0 : index
    %3 = vector.load %arg5[%c0, %c0_1] : memref<128x8xf32, #tpu.memory_space<vmem>>, vector<128x8xf32>
    %c0_2 = arith.constant 0 : index
    %c0_3 = arith.constant 0 : index
    %4 = vector.load %arg2[%c0_2, %c0_3] : memref<128x64xbf16, #tpu.memory_space<vmem>>, vector<128x64xbf16>
    %c0_4 = arith.constant 0 : index
    %c0_5 = arith.constant 0 : index
    %5 = vector.load %arg3[%c0_4, %c0_5] : memref<64x8xbf16, #tpu.memory_space<vmem>>, vector<64x8xbf16>
    %cst = arith.constant dense<0.000000e+00> : vector<128x8xf32>
    %6 = tpu.matmul %4, %5, %cst {dimension_numbers = #tpu.dot_dimension_numbers<[1], [0], [0], [1], [0, 0, 1, 1], [], []>} : vector<128x64xbf16>, vector<64x8xbf16>, vector<128x8xf32> -> vector<128x8xf32>
    %7 = arith.addf %3, %6 : vector<128x8xf32>
    %c0_6 = arith.constant 0 : index
    %c0_7 = arith.constant 0 : index
    %8 = vector.load %arg5[%c0_6, %c0_7] : memref<128x8xf32, #tpu.memory_space<vmem>>, vector<128x8xf32>
    tpu.vector_store %arg5[%c0_6, %c0_7], %7 {strides = array<i32>} : memref<128x8xf32, #tpu.memory_space<vmem>>, vector<128x8xf32>,
    %c0_i32_8 = arith.constant 0 : i32
    %9 = arith.cmpi eq, %arg1, %c0_i32_8 : i32
    %10 = arith.extui %9 : i1 to i32
    %c0_i32_9 = arith.constant 0 : i32
    %11 = arith.cmpi ne, %10, %c0_i32_9 : i32
    scf.if %11 {
      %c0_10 = arith.constant 0 : index
      %c0_11 = arith.constant 0 : index
      %12 = vector.load %arg5[%c0_10, %c0_11] : memref<128x8xf32, #tpu.memory_space<vmem>>, vector<128x8xf32>
      %cst_12 = arith.constant 0.000000e+00 : f32
      %13 = vector.broadcast %cst_12 : f32 to vector<128x8xf32>
      %14 = arith.maximumf %12, %13 : vector<128x8xf32>
      %15 = arith.truncf %14 : vector<128x8xf32> to vector<128x8xbf16>
      %c0_13 = arith.constant 0 : index
      %c0_14 = arith.constant 0 : index
      %16 = vector.load %arg4[%c0_13, %c0_14] : memref<128x8xbf16, #tpu.memory_space<vmem>>, vector<128x8xbf16>
      tpu.vector_store %arg4[%c0_13, %c0_14], %15 {strides = array<i32>} : memref<128x8xbf16, #tpu.memory_space<vmem>>, vector<128x8xbf16>,
    } else {
    }
    return
  }
  func.func @transform_0(%arg0: i32, %arg1: i32) -> (i32, i32) {
    %c0_i32 = arith.constant 0 : i32
    return %arg0, %arg1 : i32, i32
  }
  func.func @transform_1(%arg0: i32, %arg1: i32) -> (i32, i32) {
    %c0_i32 = arith.constant 0 : i32
    %c0_i32_0 = arith.constant 0 : i32
    return %arg1, %c0_i32 : i32, i32
  }
  func.func @transform_2(%arg0: i32, %arg1: i32) -> (i32, i32) {
    %c0_i32 = arith.constant 0 : i32
    %c0_i32_0 = arith.constant 0 : i32
    return %arg0, %c0_i32 : i32, i32
  }
}

module attributes {stable_mosaic.version = 11 : i64} {
  func.func @_up_gemm_stats_kernel(%arg0: i32, %arg1: i32, %arg2: memref<1x128x32xbf16, #tpu.memory_space<vmem>>, %arg3: memref<1x32x4xbf16, #tpu.memory_space<vmem>>, %arg4: memref<1x128x4xf32, #tpu.memory_space<vmem>>, %arg5: memref<1x4xf32, #tpu.memory_space<vmem>>, %arg6: memref<1x4xf32, #tpu.memory_space<vmem>>) attributes {dimension_semantics = [#tpu.dimension_semantics<arbitrary>, #tpu.dimension_semantics<arbitrary>], iteration_bounds = array<i64: 4, 1>, scalar_prefetch = 0 : i64, scratch_operands = 0 : i64, tpu.core_type = #tpu.core_type<tc>, window_params = [{transform_indices = @transform_0, window_bounds = array<i64: 1, 128, 32>}, {transform_indices = @transform_1, window_bounds = array<i64: 1, 32, 4>}, {transform_indices = @transform_2, window_bounds = array<i64: 1, 128, 4>}, {pipeline_mode = #tpu.pipeline_mode<synchronous>, transform_indices = @transform_3, window_bounds = array<i64: 1, 4>}, {pipeline_mode = #tpu.pipeline_mode<synchronous>, transform_indices = @transform_4, window_bounds = array<i64: 1, 4>}]} {
    %c0_i32 = arith.constant 0 : i32
    %0 = arith.cmpi eq, %arg0, %c0_i32 : i32
    %c0_i32_0 = arith.constant 0 : i32
    %1 = arith.cmpi eq, %arg1, %c0_i32_0 : i32
    %2 = arith.andi %0, %1 : i1
    %3 = arith.extui %2 : i1 to i32
    %c0_i32_1 = arith.constant 0 : i32
    %4 = arith.cmpi ne, %3, %c0_i32_1 : i32
    scf.if %4 {
      %cst_20 = arith.constant 0.000000e+00 : f32
      %24 = vector.broadcast %cst_20 : f32 to vector<1x4xf32>
      %c0_21 = arith.constant 0 : index
      %c0_22 = arith.constant 0 : index
      %25 = vector.load %arg5[%c0_21, %c0_22] : memref<1x4xf32, #tpu.memory_space<vmem>>, vector<1x4xf32>
      tpu.vector_store %arg5[%c0_21, %c0_22], %24 {strides = array<i32>} : memref<1x4xf32, #tpu.memory_space<vmem>>, vector<1x4xf32>,
      %cst_23 = arith.constant 0.000000e+00 : f32
      %26 = vector.broadcast %cst_23 : f32 to vector<1x4xf32>
      %c0_24 = arith.constant 0 : index
      %c0_25 = arith.constant 0 : index
      %27 = vector.load %arg6[%c0_24, %c0_25] : memref<1x4xf32, #tpu.memory_space<vmem>>, vector<1x4xf32>
      tpu.vector_store %arg6[%c0_24, %c0_25], %26 {strides = array<i32>} : memref<1x4xf32, #tpu.memory_space<vmem>>, vector<1x4xf32>,
    } else {
    }
    %c0 = arith.constant 0 : index
    %c0_2 = arith.constant 0 : index
    %c0_3 = arith.constant 0 : index
    %5 = vector.load %arg2[%c0, %c0_2, %c0_3] : memref<1x128x32xbf16, #tpu.memory_space<vmem>>, vector<1x128x32xbf16>
    %6 = vector.shape_cast %5 : vector<1x128x32xbf16> to vector<128x32xbf16>
    %c0_4 = arith.constant 0 : index
    %c0_5 = arith.constant 0 : index
    %c0_6 = arith.constant 0 : index
    %7 = vector.load %arg3[%c0_4, %c0_5, %c0_6] : memref<1x32x4xbf16, #tpu.memory_space<vmem>>, vector<1x32x4xbf16>
    %8 = vector.shape_cast %7 : vector<1x32x4xbf16> to vector<32x4xbf16>
    %cst = arith.constant dense<0.000000e+00> : vector<128x4xf32>
    %9 = tpu.matmul %6, %8, %cst {dimension_numbers = #tpu.dot_dimension_numbers<[1], [0], [0], [1], [0, 0, 1, 1], [], []>} : vector<128x32xbf16>, vector<32x4xbf16>, vector<128x4xf32> -> vector<128x4xf32>
    %c0_7 = arith.constant 0 : index
    %c0_8 = arith.constant 0 : index
    %c0_9 = arith.constant 0 : index
    %10 = vector.load %arg4[%c0_7, %c0_8, %c0_9] : memref<1x128x4xf32, #tpu.memory_space<vmem>>, vector<1x128x4xf32>
    %11 = vector.shape_cast %10 : vector<1x128x4xf32> to vector<128x4xf32>
    %12 = vector.shape_cast %9 : vector<128x4xf32> to vector<1x128x4xf32>
    tpu.vector_store %arg4[%c0_7, %c0_8, %c0_9], %12 {strides = array<i32>} : memref<1x128x4xf32, #tpu.memory_space<vmem>>, vector<1x128x4xf32>,
    %c0_10 = arith.constant 0 : index
    %c0_11 = arith.constant 0 : index
    %13 = vector.load %arg5[%c0_10, %c0_11] : memref<1x4xf32, #tpu.memory_space<vmem>>, vector<1x4xf32>
    %cst_12 = arith.constant dense<0.000000e+00> : vector<4xf32>
    %14 = vector.multi_reduction <add>, %9, %cst_12 [0] : vector<128x4xf32> to vector<4xf32>
    %15 = vector.shape_cast %14 : vector<4xf32> to vector<1x4xf32>
    %16 = arith.addf %13, %15 : vector<1x4xf32>
    %c0_13 = arith.constant 0 : index
    %c0_14 = arith.constant 0 : index
    %17 = vector.load %arg5[%c0_13, %c0_14] : memref<1x4xf32, #tpu.memory_space<vmem>>, vector<1x4xf32>
    tpu.vector_store %arg5[%c0_13, %c0_14], %16 {strides = array<i32>} : memref<1x4xf32, #tpu.memory_space<vmem>>, vector<1x4xf32>,
    %c0_15 = arith.constant 0 : index
    %c0_16 = arith.constant 0 : index
    %18 = vector.load %arg6[%c0_15, %c0_16] : memref<1x4xf32, #tpu.memory_space<vmem>>, vector<1x4xf32>
    %19 = arith.mulf %9, %9 : vector<128x4xf32>
    %cst_17 = arith.constant dense<0.000000e+00> : vector<4xf32>
    %20 = vector.multi_reduction <add>, %19, %cst_17 [0] : vector<128x4xf32> to vector<4xf32>
    %21 = vector.shape_cast %20 : vector<4xf32> to vector<1x4xf32>
    %22 = arith.addf %18, %21 : vector<1x4xf32>
    %c0_18 = arith.constant 0 : index
    %c0_19 = arith.constant 0 : index
    %23 = vector.load %arg6[%c0_18, %c0_19] : memref<1x4xf32, #tpu.memory_space<vmem>>, vector<1x4xf32>
    tpu.vector_store %arg6[%c0_18, %c0_19], %22 {strides = array<i32>} : memref<1x4xf32, #tpu.memory_space<vmem>>, vector<1x4xf32>,
    return
  }
  func.func @transform_0(%arg0: i32, %arg1: i32) -> (i32, i32, i32) {
    %c0_i32 = arith.constant 0 : i32
    %c0_i32_0 = arith.constant 0 : i32
    return %arg0, %arg1, %c0_i32 : i32, i32, i32
  }
  func.func @transform_1(%arg0: i32, %arg1: i32) -> (i32, i32, i32) {
    %c0_i32 = arith.constant 0 : i32
    %c0_i32_0 = arith.constant 0 : i32
    %c0_i32_1 = arith.constant 0 : i32
    return %arg0, %c0_i32, %c0_i32_0 : i32, i32, i32
  }
  func.func @transform_2(%arg0: i32, %arg1: i32) -> (i32, i32, i32) {
    %c0_i32 = arith.constant 0 : i32
    %c0_i32_0 = arith.constant 0 : i32
    return %arg0, %arg1, %c0_i32 : i32, i32, i32
  }
  func.func @transform_3(%arg0: i32, %arg1: i32) -> (i32, i32) {
    %c0_i32 = arith.constant 0 : i32
    %c0_i32_0 = arith.constant 0 : i32
    %c0_i32_1 = arith.constant 0 : i32
    return %c0_i32, %c0_i32_0 : i32, i32
  }
  func.func @transform_4(%arg0: i32, %arg1: i32) -> (i32, i32) {
    %c0_i32 = arith.constant 0 : i32
    %c0_i32_0 = arith.constant 0 : i32
    %c0_i32_1 = arith.constant 0 : i32
    return %c0_i32, %c0_i32_0 : i32, i32
  }
}

module attributes {stable_mosaic.version = 11 : i64} {
  func.func @_scale_shift_kernel(%arg0: i32, %arg1: i32, %arg2: memref<1x128x4xf32, #tpu.memory_space<vmem>>, %arg3: memref<1x4xf32, #tpu.memory_space<vmem>>, %arg4: memref<1x4xf32, #tpu.memory_space<vmem>>, %arg5: memref<1x128x4xf32, #tpu.memory_space<vmem>>) attributes {dimension_semantics = [#tpu.dimension_semantics<parallel>, #tpu.dimension_semantics<parallel>], iteration_bounds = array<i64: 4, 1>, scalar_prefetch = 0 : i64, scratch_operands = 0 : i64, tpu.core_type = #tpu.core_type<tc>, window_params = [{transform_indices = @transform_0, window_bounds = array<i64: 1, 128, 4>}, {pipeline_mode = #tpu.pipeline_mode<synchronous>, transform_indices = @transform_1, window_bounds = array<i64: 1, 4>}, {pipeline_mode = #tpu.pipeline_mode<synchronous>, transform_indices = @transform_2, window_bounds = array<i64: 1, 4>}, {transform_indices = @transform_3, window_bounds = array<i64: 1, 128, 4>}]} {
    %c0 = arith.constant 0 : index
    %c0_0 = arith.constant 0 : index
    %c0_1 = arith.constant 0 : index
    %0 = vector.load %arg2[%c0, %c0_0, %c0_1] : memref<1x128x4xf32, #tpu.memory_space<vmem>>, vector<1x128x4xf32>
    %1 = vector.shape_cast %0 : vector<1x128x4xf32> to vector<128x4xf32>
    %c0_2 = arith.constant 0 : index
    %c0_3 = arith.constant 0 : index
    %2 = vector.load %arg3[%c0_2, %c0_3] : memref<1x4xf32, #tpu.memory_space<vmem>>, vector<1x4xf32>
    %3 = vector.broadcast %2 : vector<1x4xf32> to vector<128x4xf32>
    %4 = arith.mulf %1, %3 : vector<128x4xf32>
    %c0_4 = arith.constant 0 : index
    %c0_5 = arith.constant 0 : index
    %5 = vector.load %arg4[%c0_4, %c0_5] : memref<1x4xf32, #tpu.memory_space<vmem>>, vector<1x4xf32>
    %6 = vector.broadcast %5 : vector<1x4xf32> to vector<128x4xf32>
    %7 = arith.addf %4, %6 : vector<128x4xf32>
    %c0_6 = arith.constant 0 : index
    %c0_7 = arith.constant 0 : index
    %c0_8 = arith.constant 0 : index
    %8 = vector.load %arg5[%c0_6, %c0_7, %c0_8] : memref<1x128x4xf32, #tpu.memory_space<vmem>>, vector<1x128x4xf32>
    %9 = vector.shape_cast %8 : vector<1x128x4xf32> to vector<128x4xf32>
    %10 = vector.shape_cast %7 : vector<128x4xf32> to vector<1x128x4xf32>
    tpu.vector_store %arg5[%c0_6, %c0_7, %c0_8], %10 {strides = array<i32>} : memref<1x128x4xf32, #tpu.memory_space<vmem>>, vector<1x128x4xf32>,
    return
  }
  func.func @transform_0(%arg0: i32, %arg1: i32) -> (i32, i32, i32) {
    %c0_i32 = arith.constant 0 : i32
    %c0_i32_0 = arith.constant 0 : i32
    return %arg0, %arg1, %c0_i32 : i32, i32, i32
  }
  func.func @transform_1(%arg0: i32, %arg1: i32) -> (i32, i32) {
    %c0_i32 = arith.constant 0 : i32
    %c0_i32_0 = arith.constant 0 : i32
    %c0_i32_1 = arith.constant 0 : i32
    return %c0_i32, %c0_i32_0 : i32, i32
  }
  func.func @transform_2(%arg0: i32, %arg1: i32) -> (i32, i32) {
    %c0_i32 = arith.constant 0 : i32
    %c0_i32_0 = arith.constant 0 : i32
    %c0_i32_1 = arith.constant 0 : i32
    return %c0_i32, %c0_i32_0 : i32, i32
  }
  func.func @transform_3(%arg0: i32, %arg1: i32) -> (i32, i32, i32) {
    %c0_i32 = arith.constant 0 : i32
    %c0_i32_0 = arith.constant 0 : i32
    return %arg0, %arg1, %c0_i32 : i32, i32, i32
  }
}

</mosaic_0001>

<llo_original>
// kernel: unet_innermost_forward.4
$region0: #{unet_innermost_forward.4}
  #allocation0 [shape = 'u32[]', space=smem, size = 0x4, offset = 0x4, fixed_abs, tag = 'smem constant byte address 0x4 - core index']
  #allocation1 [shape = 'u32[72,128]{1,0:T(1,128)}', space=vmem, size = 0x9000, scoped, tag = 'internal scratch']
  %s0 = inlined_call_operand.vmem [shape: f32[16,128], index: 0, kind: input, shape index: {}]
  %s1 = inlined_call_operand.vmem [shape: f32[16,128], index: 1, kind: output, shape index: {}]
  %s2 = sld [smem:[#allocation0]]
  $region14: #{unet_innermost_forward.4} parent=0
    _
  %s4 = ssub.s32 1, %s2
  %s5 = scalar_select 0, %s4, %s2
  // Predicated region
  $region2: #{unet_innermost_forward.4} parent=0 // pred_check
    _
  $region3: #{unet_innermost_forward.4} parent=0 // pred_check_branch
    %7 = sbr.rel (0) target = $region5
  $region4: #{unet_innermost_forward.4} parent=0 // pred_region
    _
  $region5: #{unet_innermost_forward.4} parent=0 // pred_fallthru
    _
  %v8 = vld [vmem:[%s0] sm:$0xff]
  %v9 = vld [vmem:[%s0 + $0x8] sm:$0xff]
  %vm10 = vcmp.ge.f32.partialorder %v8, 0.0
  %vm11 = vcmp.ge.f32.partialorder %v9, 0.0
  %v12 = vmul.f32 %v8, 0.2
  %v13 = vmul.f32 %v9, 0.2
  %v14 = vsel %vm10, %v8, %v12
  %v15 = vsel %vm11, %v9, %v13
  %16 = vst [vmem:[%s1] sm:$0xff] %v14
  %17 = vst [vmem:[%s1 + $0x8] sm:$0xff] %v15
  // Predicated region
  $region6: #{unet_innermost_forward.4} parent=0 // pred_check
    _
  $region7: #{unet_innermost_forward.4} parent=0 // pred_check_branch
    %19 = sbr.rel (0) target = $region9
  $region8: #{unet_innermost_forward.4} parent=0 // pred_region
    _
  $region9: #{unet_innermost_forward.4} parent=0 // pred_fallthru
    _
  // Predicated region
  $region10: #{unet_innermost_forward.4} parent=0 // pred_check
    _
  $region11: #{unet_innermost_forward.4} parent=0 // pred_check_branch
    %21 = sbr.rel (0) target = $region13
  $region12: #{unet_innermost_forward.4} parent=0 // pred_region
    _
  $region13: #{unet_innermost_forward.4} parent=0 // pred_fallthru
    _

// kernel: unet_innermost_forward.5
$region0: #{unet_innermost_forward.5}
  #allocation0 [shape = 'u32[]', space=smem, size = 0x4, offset = 0x4, fixed_abs, tag = 'smem constant byte address 0x4 - core index']
  #allocation1 [shape = 'u32[72,128]{1,0:T(1,128)}', space=vmem, size = 0x9000, scoped, tag = 'internal scratch']
  #allocation2 [shape = 'f32[128,8]{1,0:T(8,128)}', space=vmem, size = 0x10000, scoped, tag = 'scratch operand']
  %s0 = inlined_call_operand.vmem [shape: bf16[128,64], index: 0, kind: input, shape index: {}]
  %s1 = inlined_call_operand.vmem [shape: bf16[64,8], index: 1, kind: input, shape index: {}]
  %s2 = inlined_call_operand.vmem [shape: bf16[128,8], index: 2, kind: output, shape index: {}]
  %s3 = sld [smem:[#allocation0]]
  $region26: #{unet_innermost_forward.5} parent=0
    _
  %s5 = ssub.s32 1, %s3
  %s6 = scalar_select 0, %s5, %s3
  // Predicated region
  $region2: #{unet_innermost_forward.5} parent=0 // pred_check
    _
  $region3: #{unet_innermost_forward.5} parent=0 // pred_check_branch
    %8 = sbr.rel (0) target = $region5
  $region4: #{unet_innermost_forward.5} parent=0 // pred_region
    _
  $region5: #{unet_innermost_forward.5} parent=0 // pred_fallthru
    _
  // Predicated region
  $region6: #{unet_innermost_forward.5} parent=0 // pred_check
    _
  $region7: #{unet_innermost_forward.5} parent=0 // pred_check_branch
    %10 = sbr.rel (0) target = $region9
  $region8: #{unet_innermost_forward.5} parent=0 // pred_region
    _
  $region9: #{unet_innermost_forward.5} parent=0 // pred_fallthru
    _
  %p12 = scmp.eq.s32.totalorder 0, 0
  // Predicated region
  $region10: #{unet_innermost_forward.5} parent=0 // pred_check
    %p13 = pneg %p12
  $region11: #{unet_innermost_forward.5} parent=0 // pred_check_branch
    %15 = sbr.rel (%p13) target = $region13
  $region12: #{unet_innermost_forward.5} parent=0 // pred_region
    %vm16 = vcmask 64512
    %17 = vst.msk [vmem:[#allocation2] sm:$0xff] %vm16, 0.0
    %18 = vst.msk [vmem:[#allocation2 + $0x8] sm:$0xff] %vm16, 0.0
    %19 = vst.msk [vmem:[#allocation2 + $0x10] sm:$0xff] %vm16, 0.0
    %20 = vst.msk [vmem:[#allocation2 + $0x18] sm:$0xff] %vm16, 0.0
    %21 = vst.msk [vmem:[#allocation2 + $0x20] sm:$0xff] %vm16, 0.0
    %22 = vst.msk [vmem:[#allocation2 + $0x28] sm:$0xff] %vm16, 0.0
    %23 = vst.msk [vmem:[#allocation2 + $0x30] sm:$0xff] %vm16, 0.0
    %24 = vst.msk [vmem:[#allocation2 + $0x38] sm:$0xff] %vm16, 0.0
    %25 = vst.msk [vmem:[#allocation2 + $0x40] sm:$0xff] %vm16, 0.0
    %26 = vst.msk [vmem:[#allocation2 + $0x48] sm:$0xff] %vm16, 0.0
    %27 = vst.msk [vmem:[#allocation2 + $0x50] sm:$0xff] %vm16, 0.0
    %28 = vst.msk [vmem:[#allocation2 + $0x58] sm:$0xff] %vm16, 0.0
    %29 = vst.msk [vmem:[#allocation2 + $0x60] sm:$0xff] %vm16, 0.0
    %30 = vst.msk [vmem:[#allocation2 + $0x68] sm:$0xff] %vm16, 0.0
    %31 = vst.msk [vmem:[#allocation2 + $0x70] sm:$0xff] %vm16, 0.0
    %32 = vst.msk [vmem:[#allocation2 + $0x78] sm:$0xff] %vm16, 0.0
  $region13: #{unet_innermost_forward.5} parent=0 // pred_fallthru
    _
  %v33 = vld [vmem:[#allocation2] sm:$0xff]
  %v34 = vld [vmem:[#allocation2 + $0x8] sm:$0xff]
  %v35 = vld [vmem:[#allocation2 + $0x10] sm:$0xff]
  %v36 = vld [vmem:[#allocation2 + $0x18] sm:$0xff]
  %v37 = vld [vmem:[#allocation2 + $0x20] sm:$0xff]
  %v38 = vld [vmem:[#allocation2 + $0x28] sm:$0xff]
  %v39 = vld [vmem:[#allocation2 + $0x30] sm:$0xff]
  %v40 = vld [vmem:[#allocation2 + $0x38] sm:$0xff]
  %v41 = vld [vmem:[#allocation2 + $0x40] sm:$0xff]
  %v42 = vld [vmem:[#allocation2 + $0x48] sm:$0xff]
  %v43 = vld [vmem:[#allocation2 + $0x50] sm:$0xff]
  %v44 = vld [vmem:[#allocation2 + $0x58] sm:$0xff]
  %v45 = vld [vmem:[#allocation2 + $0x60] sm:$0xff]
  %v46 = vld [vmem:[#allocation2 + $0x68] sm:$0xff]
  %v47 = vld [vmem:[#allocation2 + $0x70] sm:$0xff]
  %v48 = vld [vmem:[#allocation2 + $0x78] sm:$0xff]
  %v49 = vld [vmem:[%s0] sm:$0xf]
  %v50 = vld [vmem:[%s0 + $0x4] sm:$0xf]
  %v51 = vld [vmem:[%s0 + $0x8] sm:$0xf]
  %v52 = vld [vmem:[%s0 + $0xc] sm:$0xf]
  %v53 = vld [vmem:[%s0 + $0x10] sm:$0xf]
  %v54 = vld [vmem:[%s0 + $0x14] sm:$0xf]
  %v55 = vld [vmem:[%s0 + $0x18] sm:$0xf]
  %v56 = vld [vmem:[%s0 + $0x1c] sm:$0xf]
  %v57 = vld [vmem:[%s0 + $0x20] sm:$0xf]
  %v58 = vld [vmem:[%s0 + $0x24] sm:$0xf]
  %v59 = vld [vmem:[%s0 + $0x28] sm:$0xf]
  %v60 = vld [vmem:[%s0 + $0x2c] sm:$0xf]
  %v61 = vld [vmem:[%s0 + $0x30] sm:$0xf]
  %v62 = vld [vmem:[%s0 + $0x34] sm:$0xf]
  %v63 = vld [vmem:[%s0 + $0x38] sm:$0xf]
  %v64 = vld [vmem:[%s0 + $0x3c] sm:$0xf]
  %v65 = vld [vmem:[%s1] sm:$0xf]
  %v66 = vld [vmem:[%s1 + $0x4] sm:$0xf]
  %v67 = vld [vmem:[%s1 + $0x8] sm:$0xf]
  %v68 = vld [vmem:[%s1 + $0xc] sm:$0xf]
  %v69 = vld [vmem:[%s1 + $0x10] sm:$0xf]
  %v70 = vld [vmem:[%s1 + $0x14] sm:$0xf]
  %v71 = vld [vmem:[%s1 + $0x18] sm:$0xf]
  %v72 = vld [vmem:[%s1 + $0x1c] sm:$0xf]
  %v89 = vunpack.c.l.b16 %v49
  %v90 = vunpack.c.l.b16 %v50
  %v91 = vunpack.c.l.b16 %v51
  %v92 = vunpack.c.l.b16 %v52
  %v93 = vunpack.c.l.b16 %v53
  %v94 = vunpack.c.l.b16 %v54
  %v95 = vunpack.c.l.b16 %v55
  %v96 = vunpack.c.l.b16 %v56
  %v97 = vunpack.c.l.b16 %v57
  %v98 = vunpack.c.l.b16 %v58
  %v99 = vunpack.c.l.b16 %v59
  %v100 = vunpack.c.l.b16 %v60
  %v101 = vunpack.c.l.b16 %v61
  %v102 = vunpack.c.l.b16 %v62
  %v103 = vunpack.c.l.b16 %v63
  %v104 = vunpack.c.l.b16 %v64
  %v105 = vpack.c.b16 %v90, %v89
  %v106 = vpack.c.b16 %v92, %v91
  %v107 = vpack.c.b16 %v94, %v93
  %v108 = vpack.c.b16 %v96, %v95
  %v109 = vpack.c.b16 %v98, %v97
  %v110 = vpack.c.b16 %v100, %v99
  %v111 = vpack.c.b16 %v102, %v101
  %v112 = vpack.c.b16 %v104, %v103
  %v121 = vunpack.c.l.b16 %v65
  %v122 = vunpack.c.l.b16 %v66
  %v123 = vunpack.c.l.b16 %v67
  %v124 = vunpack.c.l.b16 %v68
  %v125 = vunpack.c.l.b16 %v69
  %v126 = vunpack.c.l.b16 %v70
  %v127 = vunpack.c.l.b16 %v71
  %v128 = vunpack.c.l.b16 %v72
  %v129 = vpack.c.b16 %v122, %v121
  %v130 = vpack.c.b16 %v124, %v123
  %v131 = vpack.c.b16 %v126, %v125
  %v132 = vpack.c.b16 %v128, %v127
  %vm137 = vcmask 523264
  %v139 = vsel %vm137, %v105, 0
  %v142 = vsel %vm137, %v106, 0
  %v145 = vsel %vm137, %v107, 0
  %v148 = vsel %vm137, %v108, 0
  %v151 = vsel %vm137, %v109, 0
  %v154 = vsel %vm137, %v110, 0
  %v157 = vsel %vm137, %v111, 0
  %v160 = vsel %vm137, %v112, 0
  %162 = vmatpush.bf16.msra.mxu0 0
  %163 = vmatpush.bf16.msra.mxu0 0
  %164 = vmatpush.bf16.msra.mxu0 0
  %165 = vmatpush.bf16.msra.mxu0 0
  %166 = vmatpush.bf16.msra.mxu0 %v132
  %167 = vmatpush.bf16.msra.mxu0 %v131
  %168 = vmatpush.bf16.msra.mxu0 %v130
  %169 = vmatpush.bf16.msra.mxu0 %v129
  %170 = vmatmul.bf16.gmra.mxu0 %v139
  %v171 = vpop.f32.mrf.mxu0
  %v172 = vadd.f32 0.0, %v171
  %v173 = vpop.f32.mrf.mxu0
  %v174 = vadd.f32 0.0, %v173
  %175 = vmatmul.bf16.gmra.mxu0 %v142
  %v176 = vpop.f32.mrf.mxu0
  %v177 = vadd.f32 0.0, %v176
  %v178 = vpop.f32.mrf.mxu0
  %v179 = vadd.f32 0.0, %v178
  %180 = vmatmul.bf16.gmra.mxu0 %v145
  %v181 = vpop.f32.mrf.mxu0
  %v182 = vadd.f32 0.0, %v181
  %v183 = vpop.f32.mrf.mxu0
  %v184 = vadd.f32 0.0, %v183
  %185 = vmatmul.bf16.gmra.mxu0 %v148
  %v186 = vpop.f32.mrf.mxu0
  %v187 = vadd.f32 0.0, %v186
  %v188 = vpop.f32.mrf.mxu0
  %v189 = vadd.f32 0.0, %v188
  %190 = vmatmul.bf16.gmra.mxu0 %v151
  %v191 = vpop.f32.mrf.mxu0
  %v192 = vadd.f32 0.0, %v191
  %v193 = vpop.f32.mrf.mxu0
  %v194 = vadd.f32 0.0, %v193
  %195 = vmatmul.bf16.gmra.mxu0 %v154
  %v196 = vpop.f32.mrf.mxu0
  %v197 = vadd.f32 0.0, %v196
  %v198 = vpop.f32.mrf.mxu0
  %v199 = vadd.f32 0.0, %v198
  %200 = vmatmul.bf16.gmra.mxu0 %v157
  %v201 = vpop.f32.mrf.mxu0
  %v202 = vadd.f32 0.0, %v201
  %v203 = vpop.f32.mrf.mxu0
  %v204 = vadd.f32 0.0, %v203
  %205 = vmatmul.bf16.gmra.mxu0 %v160
  %v206 = vpop.f32.mrf.mxu0
  %v207 = vadd.f32 0.0, %v206
  %v208 = vpop.f32.mrf.mxu0
  %v209 = vadd.f32 0.0, %v208
  %210 = vdwg.mxu0
  %v211 = vadd.f32 %v33, %v172
  %v212 = vadd.f32 %v34, %v174
  %v213 = vadd.f32 %v35, %v177
  %v214 = vadd.f32 %v36, %v179
  %v215 = vadd.f32 %v37, %v182
  %v216 = vadd.f32 %v38, %v184
  %v217 = vadd.f32 %v39, %v187
  %v218 = vadd.f32 %v40, %v189
  %v219 = vadd.f32 %v41, %v192
  %v220 = vadd.f32 %v42, %v194
  %v221 = vadd.f32 %v43, %v197
  %v222 = vadd.f32 %v44, %v199
  %v223 = vadd.f32 %v45, %v202
  %v224 = vadd.f32 %v46, %v204
  %v225 = vadd.f32 %v47, %v207
  %v226 = vadd.f32 %v48, %v209
  %vm227 = vcmask 64512
  %228 = vst.msk [vmem:[#allocation2] sm:$0xff] %vm227, %v211
  %229 = vst.msk [vmem:[#allocation2 + $0x8] sm:$0xff] %vm227, %v212
  %230 = vst.msk [vmem:[#allocation2 + $0x10] sm:$0xff] %vm227, %v213
  %231 = vst.msk [vmem:[#allocation2 + $0x18] sm:$0xff] %vm227, %v214
  %232 = vst.msk [vmem:[#allocation2 + $0x20] sm:$0xff] %vm227, %v215
  %233 = vst.msk [vmem:[#allocation2 + $0x28] sm:$0xff] %vm227, %v216
  %234 = vst.msk [vmem:[#allocation2 + $0x30] sm:$0xff] %vm227, %v217
  %235 = vst.msk [vmem:[#allocation2 + $0x38] sm:$0xff] %vm227, %v218
  %236 = vst.msk [vmem:[#allocation2 + $0x40] sm:$0xff] %vm227, %v219
  %237 = vst.msk [vmem:[#allocation2 + $0x48] sm:$0xff] %vm227, %v220
  %238 = vst.msk [vmem:[#allocation2 + $0x50] sm:$0xff] %vm227, %v221
  %239 = vst.msk [vmem:[#allocation2 + $0x58] sm:$0xff] %vm227, %v222
  %240 = vst.msk [vmem:[#allocation2 + $0x60] sm:$0xff] %vm227, %v223
  %241 = vst.msk [vmem:[#allocation2 + $0x68] sm:$0xff] %vm227, %v224
  %242 = vst.msk [vmem:[#allocation2 + $0x70] sm:$0xff] %vm227, %v225
  %243 = vst.msk [vmem:[#allocation2 + $0x78] sm:$0xff] %vm227, %v226
  // Predicated region
  $region14: #{unet_innermost_forward.5} parent=0 // pred_check
    %p244 = pneg %p12
  $region15: #{unet_innermost_forward.5} parent=0 // pred_check_branch
    %246 = sbr.rel (%p244) target = $region17
  $region16: #{unet_innermost_forward.5} parent=0 // pred_region
    %v247 = vld [vmem:[#allocation2] sm:$0xff]
    %v248 = vld [vmem:[#allocation2 + $0x8] sm:$0xff]
    %v249 = vld [vmem:[#allocation2 + $0x10] sm:$0xff]
    %v250 = vld [vmem:[#allocation2 + $0x18] sm:$0xff]
    %v251 = vld [vmem:[#allocation2 + $0x20] sm:$0xff]
    %v252 = vld [vmem:[#allocation2 + $0x28] sm:$0xff]
    %v253 = vld [vmem:[#allocation2 + $0x30] sm:$0xff]
    %v254 = vld [vmem:[#allocation2 + $0x38] sm:$0xff]
    %v255 = vld [vmem:[#allocation2 + $0x40] sm:$0xff]
    %v256 = vld [vmem:[#allocation2 + $0x48] sm:$0xff]
    %v257 = vld [vmem:[#allocation2 + $0x50] sm:$0xff]
    %v258 = vld [vmem:[#allocation2 + $0x58] sm:$0xff]
    %v259 = vld [vmem:[#allocation2 + $0x60] sm:$0xff]
    %v260 = vld [vmem:[#allocation2 + $0x68] sm:$0xff]
    %v261 = vld [vmem:[#allocation2 + $0x70] sm:$0xff]
    %v262 = vld [vmem:[#allocation2 + $0x78] sm:$0xff]
    %v263 = vmax.f32 %v247, 0.0
    %v264 = vmax.f32 %v248, 0.0
    %v265 = vmax.f32 %v249, 0.0
    %v266 = vmax.f32 %v250, 0.0
    %v267 = vmax.f32 %v251, 0.0
    %v268 = vmax.f32 %v252, 0.0
    %v269 = vmax.f32 %v253, 0.0
    %v270 = vmax.f32 %v254, 0.0
    %v271 = vmax.f32 %v255, 0.0
    %v272 = vmax.f32 %v256, 0.0
    %v273 = vmax.f32 %v257, 0.0
    %v274 = vmax.f32 %v258, 0.0
    %v275 = vmax.f32 %v259, 0.0
    %v276 = vmax.f32 %v260, 0.0
    %v277 = vmax.f32 %v261, 0.0
    %v278 = vmax.f32 %v262, 0.0
    %v279 = vpack.c.bf16 %v263, %v263
    %v280 = vpack.c.bf16 %v264, %v264
    %v281 = vpack.c.bf16 %v265, %v265
    %v282 = vpack.c.bf16 %v266, %v266
    %v283 = vpack.c.bf16 %v267, %v267
    %v284 = vpack.c.bf16 %v268, %v268
    %v285 = vpack.c.bf16 %v269, %v269
    %v286 = vpack.c.bf16 %v270, %v270
    %v287 = vpack.c.bf16 %v271, %v271
    %v288 = vpack.c.bf16 %v272, %v272
    %v289 = vpack.c.bf16 %v273, %v273
    %v290 = vpack.c.bf16 %v274, %v274
    %v291 = vpack.c.bf16 %v275, %v275
    %v292 = vpack.c.bf16 %v276, %v276
    %v293 = vpack.c.bf16 %v277, %v277
    %v294 = vpack.c.bf16 %v278, %v278
    %vm295 = vcmask 60416
    %296 = vst.msk [vmem:[%s2] sm:$0xf] %vm295, %v279
    %297 = vst.msk [vmem:[%s2 + $0x4] sm:$0xf] %vm295, %v280
    %298 = vst.msk [vmem:[%s2 + $0x8] sm:$0xf] %vm295, %v281
    %299 = vst.msk [vmem:[%s2 + $0xc] sm:$0xf] %vm295, %v282
    %300 = vst.msk [vmem:[%s2 + $0x10] sm:$0xf] %vm295, %v283
    %301 = vst.msk [vmem:[%s2 + $0x14] sm:$0xf] %vm295, %v284
    %302 = vst.msk [vmem:[%s2 + $0x18] sm:$0xf] %vm295, %v285
    %303 = vst.msk [vmem:[%s2 + $0x1c] sm:$0xf] %vm295, %v286
    %304 = vst.msk [vmem:[%s2 + $0x20] sm:$0xf] %vm295, %v287
    %305 = vst.msk [vmem:[%s2 + $0x24] sm:$0xf] %vm295, %v288
    %306 = vst.msk [vmem:[%s2 + $0x28] sm:$0xf] %vm295, %v289
    %307 = vst.msk [vmem:[%s2 + $0x2c] sm:$0xf] %vm295, %v290
    %308 = vst.msk [vmem:[%s2 + $0x30] sm:$0xf] %vm295, %v291
    %309 = vst.msk [vmem:[%s2 + $0x34] sm:$0xf] %vm295, %v292
    %310 = vst.msk [vmem:[%s2 + $0x38] sm:$0xf] %vm295, %v293
    %311 = vst.msk [vmem:[%s2 + $0x3c] sm:$0xf] %vm295, %v294
  $region17: #{unet_innermost_forward.5} parent=0 // pred_fallthru
    _
  // Predicated region
  $region18: #{unet_innermost_forward.5} parent=0 // pred_check
    _
  $region19: #{unet_innermost_forward.5} parent=0 // pred_check_branch
    %313 = sbr.rel (0) target = $region21
  $region20: #{unet_innermost_forward.5} parent=0 // pred_region
    _
  $region21: #{unet_innermost_forward.5} parent=0 // pred_fallthru
    _
  // Predicated region
  $region22: #{unet_innermost_forward.5} parent=0 // pred_check
    _
  $region23: #{unet_innermost_forward.5} parent=0 // pred_check_branch
    %315 = sbr.rel (0) target = $region25
  $region24: #{unet_innermost_forward.5} parent=0 // pred_region
    _
  $region25: #{unet_innermost_forward.5} parent=0 // pred_fallthru
    _

// kernel: unet_innermost_forward.7
$region0: #{unet_innermost_forward.7}
  #allocation0 [shape = 'u32[]', space=smem, size = 0x4, offset = 0x4, fixed_abs, tag = 'smem constant byte address 0x4 - core index']
  #allocation1 [shape = 'u32[72,128]{1,0:T(1,128)}', space=vmem, size = 0x9000, scoped, tag = 'internal scratch']
  %s0 = inlined_call_operand.vmem [shape: f32[4,128,4], index: 0, kind: input, shape index: {}]
  %s1 = inlined_call_operand.vmem [shape: f32[1,4], index: 1, kind: input, shape index: {}]
  %s2 = inlined_call_operand.vmem [shape: f32[1,4], index: 2, kind: input, shape index: {}]
  %s3 = inlined_call_operand.vmem [shape: f32[4,128,4], index: 3, kind: output, shape index: {}]
  %s4 = sld [smem:[#allocation0]]
  $region45: #{unet_innermost_forward.7} parent=0
    _
  %s6 = ssub.s32 1, %s4
  %s7 = scalar_select 0, %s6, %s4
  loop: start=0, step=1, limit=6
  $region2: #{unet_innermost_forward.7} parent=0 // loop_pre_header
    _
  $region3: #{unet_innermost_forward.7} parent=0 // loop_header
    %s9 = sphi 0, %s13
    %p10 = scmp.ge.s32.totalorder %s9, 6
    %s16 = sphi 0, %s28
    %s17 = sphi 0, %s24
    %s18 = sphi 0, %s16
    %s19 = sphi 0, %s17
    %s20 = sphi 0, %s18
    %s21 = sphi 0, %s19
    %s33 = sphi 0, %s35
    %s36 = sphi 0, %s33
    %s37 = sphi 0, %s36
    %s53 = sphi 0, %s37
    %s57 = sphi 0, %s57
    %s59 = sphi 0, %s57
    %s60 = sphi 0, %s59
    %s74 = sphi 0, %s60
    %s78 = sphi 0, %s78
    %s80 = sphi 0, %s78
    %s81 = sphi 0, %s80
    %s95 = sphi 0, %s81
    %s103 = sphi 0, %s105
    %s106 = sphi 0, %s103
    %s107 = sphi 0, %s106
    %s123 = sphi 0, %s107
  $region4: #{unet_innermost_forward.7} parent=0 // loop_header_branch
    %12 = sbr.rel (%p10) target = $region8
  $region5: #{unet_innermost_forward.7} parent=0 // loop_body
    %s14 = ssub.s32 %s9, 1
    %s15 = ssub.s32 %s9, 2
    %s22 = sadd.s32 1, %s17
    %p23 = scmp.ge.s32.totalorder %s22, 1
    %s24 = scalar_select %p23, 0, %s22
    %s25 = sadd.s32 1, %s16
    %s26 = scalar_select %p23, %s25, %s16
    %p27 = scmp.ge.s32.totalorder %s26, 4
    %s28 = scalar_select %p27, 0, %s26
    %s29 = ssub.s32 %s16, %s28
    %s30 = ssub.s32 %s17, %s24
    %s31 = sor.u32 %s29, %s30
    %p32 = scmp.eq.s32.totalorder %s31, 0
    %s34 = sadd.s32 %s33, 1
    %s35 = scalar_select %p32, %s33, %s34
    %p38 = pneg %p32
    %p39 = scmp.eq.s32.totalorder %s9, 3
    %p40 = por %p38, %p39
    %p41 = scmp.ne.s32.totalorder %s33, %s36
    %p42 = scmp.eq.s32.totalorder %s9, 0
    %p43 = por %p41, %p42
    %p44 = scmp.ne.s32.totalorder %s33, %s36
    %p45 = scmp.eq.s32.totalorder %s14, 3
    %p46 = por %p44, %p45
    %p47 = scmp.ne.s32.totalorder %s36, %s37
    %p48 = scmp.eq.s32.totalorder %s14, 0
    %p49 = por %p47, %p48
    %p50 = scmp.ne.s32.totalorder %s36, %s37
    %p51 = scmp.eq.s32.totalorder %s15, 3
    %p52 = por %p50, %p51
    %p54 = scmp.ne.s32.totalorder %s37, %s53
    %p55 = scmp.eq.s32.totalorder %s15, 0
    %p56 = por %p54, %p55
    %s58 = sadd.s32 %s57, 1
    %p61 = scmp.eq.s32.totalorder %s9, 3
    %p62 = scmp.ne.s32.totalorder %s57, %s59
    %p63 = scmp.eq.s32.totalorder %s9, 0
    %p64 = por %p62, %p63
    %p65 = scmp.ne.s32.totalorder %s57, %s59
    %p66 = scmp.eq.s32.totalorder %s14, 3
    %p67 = por %p65, %p66
    %p68 = scmp.ne.s32.totalorder %s59, %s60
    %p69 = scmp.eq.s32.totalorder %s14, 0
    %p70 = por %p68, %p69
    %p71 = scmp.ne.s32.totalorder %s59, %s60
    %p72 = scmp.eq.s32.totalorder %s15, 3
    %p73 = por %p71, %p72
    %p75 = scmp.ne.s32.totalorder %s60, %s74
    %p76 = scmp.eq.s32.totalorder %s15, 0
    %p77 = por %p75, %p76
    %s79 = sadd.s32 %s78, 1
    %p82 = scmp.eq.s32.totalorder %s9, 3
    %p83 = scmp.ne.s32.totalorder %s78, %s80
    %p84 = scmp.eq.s32.totalorder %s9, 0
    %p85 = por %p83, %p84
    %p86 = scmp.ne.s32.totalorder %s78, %s80
    %p87 = scmp.eq.s32.totalorder %s14, 3
    %p88 = por %p86, %p87
    %p89 = scmp.ne.s32.totalorder %s80, %s81
    %p90 = scmp.eq.s32.totalorder %s14, 0
    %p91 = por %p89, %p90
    %p92 = scmp.ne.s32.totalorder %s80, %s81
    %p93 = scmp.eq.s32.totalorder %s15, 3
    %p94 = por %p92, %p93
    %p96 = scmp.ne.s32.totalorder %s81, %s95
    %p97 = scmp.eq.s32.totalorder %s15, 0
    %p98 = por %p96, %p97
    %s99 = ssub.s32 %s16, %s28
    %s100 = ssub.s32 %s17, %s24
    %s101 = sor.u32 %s99, %s100
    %p102 = scmp.eq.s32.totalorder %s101, 0
    %s104 = sadd.s32 %s103, 1
    %s105 = scalar_select %p102, %s103, %s104
    %p108 = pneg %p102
    %p109 = scmp.eq.s32.totalorder %s9, 3
    %p110 = por %p108, %p109
    %p111 = scmp.ne.s32.totalorder %s103, %s106
    %p112 = scmp.eq.s32.totalorder %s9, 0
    %p113 = por %p111, %p112
    %p114 = scmp.ne.s32.totalorder %s103, %s106
    %p115 = scmp.eq.s32.totalorder %s14, 3
    %p116 = por %p114, %p115
    %p117 = scmp.ne.s32.totalorder %s106, %s107
    %p118 = scmp.eq.s32.totalorder %s14, 0
    %p119 = por %p117, %p118
    %p120 = scmp.ne.s32.totalorder %s106, %s107
    %p121 = scmp.eq.s32.totalorder %s15, 3
    %p122 = por %p120, %p121
    %p124 = scmp.ne.s32.totalorder %s107, %s123
    %p125 = scmp.eq.s32.totalorder %s15, 0
    %p126 = por %p124, %p125
    %p127 = scmp.le.s32.totalorder 1, %s9
    %p128 = scmp.lt.s32.totalorder %s9, 5
    %p129 = pnand %p127, %p128
    %p130 = pneg %p129
    // Predicated region
    $region9: #{unet_innermost_forward.7} parent=5 // pred_check
      _
    $region10: #{unet_innermost_forward.7} parent=5 // pred_check_branch
      %132 = sbr.rel (%p129) target = $region12
    $region11: #{unet_innermost_forward.7} parent=5 // pred_region
      %s133 = ssub.s32 %s9, 1
      // Predicated region
      $region13: #{unet_innermost_forward.7} parent=11 // pred_check
        %p134 = pneg %p70
      $region14: #{unet_innermost_forward.7} parent=11 // pred_check_branch
        %136 = sbr.rel (%p134) target = $region16
      $region15: #{unet_innermost_forward.7} parent=11 // pred_region
        _
      $region16: #{unet_innermost_forward.7} parent=11 // pred_fallthru
        _
      // Predicated region
      $region17: #{unet_innermost_forward.7} parent=11 // pred_check
        %p137 = pneg %p91
      $region18: #{unet_innermost_forward.7} parent=11 // pred_check_branch
        %139 = sbr.rel (%p137) target = $region20
      $region19: #{unet_innermost_forward.7} parent=11 // pred_region
        _
      $region20: #{unet_innermost_forward.7} parent=11 // pred_fallthru
        _
    $region12: #{unet_innermost_forward.7} parent=5 // pred_fallthru
      _
    %p140 = scmp.lt.s32.totalorder %s9, 4
    // Predicated region
    $region21: #{unet_innermost_forward.7} parent=5 // pred_check
      %p141 = pneg %p140
    $region22: #{unet_innermost_forward.7} parent=5 // pred_check_branch
      %143 = sbr.rel (%p141) target = $region24
    $region23: #{unet_innermost_forward.7} parent=5 // pred_region
      // Predicated region
      $region25: #{unet_innermost_forward.7} parent=23 // pred_check
        %p144 = pneg %p43
      $region26: #{unet_innermost_forward.7} parent=23 // pred_check_branch
        %146 = sbr.rel (%p144) target = $region28
      $region27: #{unet_innermost_forward.7} parent=23 // pred_region
        %s147 = smul.u32 16, %s17
        %p148 = scmp.lt.s32.totalorder %s16, 3
        %s149 = scalar_select %p148, %s16, 3
        %p150 = scmp.lt.s32.totalorder %s147, 15
        %s151 = scalar_select %p150, %s147, 15
        %s152 = smul.addr %s149, 16
        %s153 = sadd.s32 %s151, %s152
        %s154 = smul.addr %s153, 8
        %s155 = scalar_lea.vmem %s0, %s154
        %s156 = smul.u32 16, %s17
      $region28: #{unet_innermost_forward.7} parent=23 // pred_fallthru
        _
    $region24: #{unet_innermost_forward.7} parent=5 // pred_fallthru
      _
    %p157 = scmp.le.s32.totalorder 1, %s9
    %p158 = scmp.lt.s32.totalorder %s9, 5
    %p159 = pnand %p157, %p158
    %p160 = pneg %p159
    // Predicated region
    $region29: #{unet_innermost_forward.7} parent=5 // pred_check
      _
    $region30: #{unet_innermost_forward.7} parent=5 // pred_check_branch
      %162 = sbr.rel (%p159) target = $region32
    $region31: #{unet_innermost_forward.7} parent=5 // pred_region
      %s163 = ssub.s32 %s9, 1
      %s164 = smul.u32 16, %s19
      %p165 = scmp.lt.s32.totalorder %s18, 3
      %s166 = scalar_select %p165, %s18, 3
      %p167 = scmp.lt.s32.totalorder %s164, 15
      %s168 = scalar_select %p167, %s164, 15
      %s169 = smul.addr %s166, 16
      %s170 = sadd.s32 %s168, %s169
      %s171 = smul.addr %s170, 8
      %s172 = scalar_lea.vmem %s0, %s171
      %p173 = pneg %p49
      %p174 = pneg %p46
      %p175 = pneg %p70
      %p176 = pneg %p67
      %p177 = pneg %p91
      %p178 = pneg %p88
      %p179 = pneg %p119
      %p180 = pneg %p116
      %s181 = smul.u32 16, %s19
      %p182 = scmp.lt.s32.totalorder %s18, 3
      %s183 = scalar_select %p182, %s18, 3
      %p184 = scmp.lt.s32.totalorder %s181, 15
      %s185 = scalar_select %p184, %s181, 15
      %s186 = smul.addr %s183, 16
      %s187 = sadd.s32 %s185, %s186
      %s188 = smul.addr %s187, 8
      %s189 = scalar_lea.vmem %s3, %s188
      %s190 = smul.u32 16, %s19
      %p191 = scmp.lt.s32.totalorder %s18, 3
      %s192 = scalar_select %p191, %s18, 3
      %p193 = scmp.lt.s32.totalorder %s190, 15
      %s194 = scalar_select %p193, %s190, 15
      %s195 = smul.addr %s192, 16
      %s196 = sadd.s32 %s194, %s195
      %s197 = smul.addr %s196, 8
      %s198 = scalar_lea.vmem %s0, %s197
      %s199 = smul.u32 16, %s19
      %s200 = smul.u32 16, %s19
      %p201 = scmp.lt.s32.totalorder %s18, 3
      %s202 = scalar_select %p201, %s18, 3
      %p203 = scmp.lt.s32.totalorder %s200, 15
      %s204 = scalar_select %p203, %s200, 15
      %s205 = smul.addr %s202, 16
      %s206 = sadd.s32 %s204, %s205
      %s207 = smul.addr %s206, 8
      %s208 = scalar_lea.vmem %s3, %s207
      %s209 = smul.u32 16, %s19
      %v210 = vld [vmem:[%s198] sm:$0xff]
      %v211 = vld [vmem:[%s198 + $0x8] sm:$0xff]
      %v212 = vld [vmem:[%s198 + $0x10] sm:$0xff]
      %v213 = vld [vmem:[%s198 + $0x18] sm:$0xff]
      %v214 = vld [vmem:[%s198 + $0x20] sm:$0xff]
      %v215 = vld [vmem:[%s198 + $0x28] sm:$0xff]
      %v216 = vld [vmem:[%s198 + $0x30] sm:$0xff]
      %v217 = vld [vmem:[%s198 + $0x38] sm:$0xff]
      %v218 = vld [vmem:[%s198 + $0x40] sm:$0xff]
      %v219 = vld [vmem:[%s198 + $0x48] sm:$0xff]
      %v220 = vld [vmem:[%s198 + $0x50] sm:$0xff]
      %v221 = vld [vmem:[%s198 + $0x58] sm:$0xff]
      %v222 = vld [vmem:[%s198 + $0x60] sm:$0xff]
      %v223 = vld [vmem:[%s198 + $0x68] sm:$0xff]
      %v224 = vld [vmem:[%s198 + $0x70] sm:$0xff]
      %v225 = vld [vmem:[%s198 + $0x78] sm:$0xff]
      %v226 = vld [vmem:[%s1] sm:$0x1]
      %v228 = vperm.slane %v226, 0
      %v230 = vmul.f32 %v210, %v228
      %v231 = vmul.f32 %v211, %v228
      %v232 = vmul.f32 %v212, %v228
      %v233 = vmul.f32 %v213, %v228
      %v234 = vmul.f32 %v214, %v228
      %v235 = vmul.f32 %v215, %v228
      %v236 = vmul.f32 %v216, %v228
      %v237 = vmul.f32 %v217, %v228
      %v238 = vmul.f32 %v218, %v228
      %v239 = vmul.f32 %v219, %v228
      %v240 = vmul.f32 %v220, %v228
      %v241 = vmul.f32 %v221, %v228
      %v242 = vmul.f32 %v222, %v228
      %v243 = vmul.f32 %v223, %v228
      %v244 = vmul.f32 %v224, %v228
      %v245 = vmul.f32 %v225, %v228
      %v246 = vld [vmem:[%s2] sm:$0x1]
      %v248 = vperm.slane %v246, 0
      %v250 = vadd.f32 %v230, %v248
      %v251 = vadd.f32 %v231, %v248
      %v252 = vadd.f32 %v232, %v248
      %v253 = vadd.f32 %v233, %v248
      %v254 = vadd.f32 %v234, %v248
      %v255 = vadd.f32 %v235, %v248
      %v256 = vadd.f32 %v236, %v248
      %v257 = vadd.f32 %v237, %v248
      %v258 = vadd.f32 %v238, %v248
      %v259 = vadd.f32 %v239, %v248
      %v260 = vadd.f32 %v240, %v248
      %v261 = vadd.f32 %v241, %v248
      %v262 = vadd.f32 %v242, %v248
      %v263 = vadd.f32 %v243, %v248
      %v264 = vadd.f32 %v244, %v248
      %v265 = vadd.f32 %v245, %v248
      %vm266 = vcmask 31744
      %267 = vst.msk [vmem:[%s208] sm:$0xff] %vm266, %v250
      %268 = vst.msk [vmem:[%s208 + $0x8] sm:$0xff] %vm266, %v251
      %269 = vst.msk [vmem:[%s208 + $0x10] sm:$0xff] %vm266, %v252
      %270 = vst.msk [vmem:[%s208 + $0x18] sm:$0xff] %vm266, %v253
      %271 = vst.msk [vmem:[%s208 + $0x20] sm:$0xff] %vm266, %v254
      %272 = vst.msk [vmem:[%s208 + $0x28] sm:$0xff] %vm266, %v255
      %273 = vst.msk [vmem:[%s208 + $0x30] sm:$0xff] %vm266, %v256
      %274 = vst.msk [vmem:[%s208 + $0x38] sm:$0xff] %vm266, %v257
      %275 = vst.msk [vmem:[%s208 + $0x40] sm:$0xff] %vm266, %v258
      %276 = vst.msk [vmem:[%s208 + $0x48] sm:$0xff] %vm266, %v259
      %277 = vst.msk [vmem:[%s208 + $0x50] sm:$0xff] %vm266, %v260
      %278 = vst.msk [vmem:[%s208 + $0x58] sm:$0xff] %vm266, %v261
      %279 = vst.msk [vmem:[%s208 + $0x60] sm:$0xff] %vm266, %v262
      %280 = vst.msk [vmem:[%s208 + $0x68] sm:$0xff] %vm266, %v263
      %281 = vst.msk [vmem:[%s208 + $0x70] sm:$0xff] %vm266, %v264
      %282 = vst.msk [vmem:[%s208 + $0x78] sm:$0xff] %vm266, %v265
      %s283 = smul.u32 16, %s19
      %p284 = scmp.lt.s32.totalorder %s18, 3
      %s285 = scalar_select %p284, %s18, 3
      %p286 = scmp.lt.s32.totalorder %s283, 15
      %s287 = scalar_select %p286, %s283, 15
      %s288 = smul.addr %s285, 16
      %s289 = sadd.s32 %s287, %s288
      %s290 = smul.addr %s289, 8
      %s291 = scalar_lea.vmem %s3, %s290
      // Predicated region
      $region33: #{unet_innermost_forward.7} parent=31 // pred_check
        %p292 = pneg %p116
      $region34: #{unet_innermost_forward.7} parent=31 // pred_check_branch
        %294 = sbr.rel (%p292) target = $region36
      $region35: #{unet_innermost_forward.7} parent=31 // pred_region
        %s295 = smul.u32 16, %s19
      $region36: #{unet_innermost_forward.7} parent=31 // pred_fallthru
        _
    $region32: #{unet_innermost_forward.7} parent=5 // pred_fallthru
      _
    %p296 = scmp.le.s32.totalorder 2, %s9
    // Predicated region
    $region37: #{unet_innermost_forward.7} parent=5 // pred_check
      %p297 = pneg %p296
    $region38: #{unet_innermost_forward.7} parent=5 // pred_check_branch
      %299 = sbr.rel (%p297) target = $region40
    $region39: #{unet_innermost_forward.7} parent=5 // pred_region
      %s300 = ssub.s32 %s9, 2
      // Predicated region
      $region41: #{unet_innermost_forward.7} parent=39 // pred_check
        %p301 = pneg %p122
      $region42: #{unet_innermost_forward.7} parent=39 // pred_check_branch
        %303 = sbr.rel (%p301) target = $region44
      $region43: #{unet_innermost_forward.7} parent=39 // pred_region
        %s304 = smul.u32 16, %s21
        %p305 = scmp.lt.s32.totalorder %s20, 3
        %s306 = scalar_select %p305, %s20, 3
        %p307 = scmp.lt.s32.totalorder %s304, 15
        %s308 = scalar_select %p307, %s304, 15
        %s309 = smul.addr %s306, 16
        %s310 = sadd.s32 %s308, %s309
        %s311 = smul.addr %s310, 8
        %s312 = scalar_lea.vmem %s3, %s311
      $region44: #{unet_innermost_forward.7} parent=39 // pred_fallthru
        _
    $region40: #{unet_innermost_forward.7} parent=5 // pred_fallthru
      _
  $region6: #{unet_innermost_forward.7} parent=0 // loop_footer
    %s13 = sadd.s32 1, %s9
  $region7: #{unet_innermost_forward.7} parent=0 // loop_footer_branch
    %8 = sbr.rel target = $region3
  $region8: #{unet_innermost_forward.7} parent=0 // loop_exit
    _

// kernel: unet_innermost_forward.6
$region0: #{unet_innermost_forward.6}
  #allocation0 [shape = 'u32[]', space=smem, size = 0x4, offset = 0x4, fixed_abs, tag = 'smem constant byte address 0x4 - core index']
  #allocation1 [shape = 'u32[72,128]{1,0:T(1,128)}', space=vmem, size = 0x9000, scoped, tag = 'internal scratch']
  %s0 = inlined_call_operand.vmem [shape: bf16[4,128,32], index: 0, kind: input, shape index: {}]
  %s1 = inlined_call_operand.vmem [shape: bf16[4,32,4], index: 1, kind: input, shape index: {}]
  %s2 = inlined_call_operand.vmem [shape: f32[4,128,4], index: 2, kind: output, shape index: {0}]
  %s3 = inlined_call_operand.vmem [shape: f32[1,4], index: 3, kind: output, shape index: {1}]
  %s4 = inlined_call_operand.vmem [shape: f32[1,4], index: 4, kind: output, shape index: {2}]
  %5 = xla_tuple %s2, %s3, %s4
  %s6 = sld [smem:[#allocation0]]
  $region61: #{unet_innermost_forward.6} parent=0
    _
  %s8 = ssub.s32 1, %s6
  %s9 = scalar_select 0, %s8, %s6
  loop: start=0, step=1, limit=6
  $region2: #{unet_innermost_forward.6} parent=0 // loop_pre_header
    _
  $region3: #{unet_innermost_forward.6} parent=0 // loop_header
    %s11 = sphi 0, %s15
    %p12 = scmp.ge.s32.totalorder %s11, 6
    %s18 = sphi 0, %s30
    %s19 = sphi 0, %s26
    %s20 = sphi 0, %s18
    %s21 = sphi 0, %s19
    %s22 = sphi 0, %s20
    %s23 = sphi 0, %s21
    %s35 = sphi 0, %s37
    %s38 = sphi 0, %s35
    %s39 = sphi 0, %s38
    %s55 = sphi 0, %s39
    %s61 = sphi 0, %s63
    %s64 = sphi 0, %s61
    %s65 = sphi 0, %s64
    %s81 = sphi 0, %s65
    %s89 = sphi 0, %s91
    %s92 = sphi 0, %s89
    %s93 = sphi 0, %s92
    %s109 = sphi 0, %s93
    %s113 = sphi 0, %s113
    %s115 = sphi 0, %s113
    %s116 = sphi 0, %s115
    %s130 = sphi 0, %s116
    %s134 = sphi 0, %s134
    %s136 = sphi 0, %s134
    %s137 = sphi 0, %s136
    %s151 = sphi 0, %s137
  $region4: #{unet_innermost_forward.6} parent=0 // loop_header_branch
    %14 = sbr.rel (%p12) target = $region8
  $region5: #{unet_innermost_forward.6} parent=0 // loop_body
    %s16 = ssub.s32 %s11, 1
    %s17 = ssub.s32 %s11, 2
    %s24 = sadd.s32 1, %s19
    %p25 = scmp.ge.s32.totalorder %s24, 1
    %s26 = scalar_select %p25, 0, %s24
    %s27 = sadd.s32 1, %s18
    %s28 = scalar_select %p25, %s27, %s18
    %p29 = scmp.ge.s32.totalorder %s28, 4
    %s30 = scalar_select %p29, 0, %s28
    %s31 = ssub.s32 %s18, %s30
    %s32 = ssub.s32 %s19, %s26
    %s33 = sor.u32 %s31, %s32
    %p34 = scmp.eq.s32.totalorder %s33, 0
    %s36 = sadd.s32 %s35, 1
    %s37 = scalar_select %p34, %s35, %s36
    %p40 = pneg %p34
    %p41 = scmp.eq.s32.totalorder %s11, 3
    %p42 = por %p40, %p41
    %p43 = scmp.ne.s32.totalorder %s35, %s38
    %p44 = scmp.eq.s32.totalorder %s11, 0
    %p45 = por %p43, %p44
    %p46 = scmp.ne.s32.totalorder %s35, %s38
    %p47 = scmp.eq.s32.totalorder %s16, 3
    %p48 = por %p46, %p47
    %p49 = scmp.ne.s32.totalorder %s38, %s39
    %p50 = scmp.eq.s32.totalorder %s16, 0
    %p51 = por %p49, %p50
    %p52 = scmp.ne.s32.totalorder %s38, %s39
    %p53 = scmp.eq.s32.totalorder %s17, 3
    %p54 = por %p52, %p53
    %p56 = scmp.ne.s32.totalorder %s39, %s55
    %p57 = scmp.eq.s32.totalorder %s17, 0
    %p58 = por %p56, %p57
    %s59 = ssub.s32 %s18, %s30
    %p60 = scmp.eq.s32.totalorder %s59, 0
    %s62 = sadd.s32 %s61, 1
    %s63 = scalar_select %p60, %s61, %s62
    %p66 = pneg %p60
    %p67 = scmp.eq.s32.totalorder %s11, 3
    %p68 = por %p66, %p67
    %p69 = scmp.ne.s32.totalorder %s61, %s64
    %p70 = scmp.eq.s32.totalorder %s11, 0
    %p71 = por %p69, %p70
    %p72 = scmp.ne.s32.totalorder %s61, %s64
    %p73 = scmp.eq.s32.totalorder %s16, 3
    %p74 = por %p72, %p73
    %p75 = scmp.ne.s32.totalorder %s64, %s65
    %p76 = scmp.eq.s32.totalorder %s16, 0
    %p77 = por %p75, %p76
    %p78 = scmp.ne.s32.totalorder %s64, %s65
    %p79 = scmp.eq.s32.totalorder %s17, 3
    %p80 = por %p78, %p79
    %p82 = scmp.ne.s32.totalorder %s65, %s81
    %p83 = scmp.eq.s32.totalorder %s17, 0
    %p84 = por %p82, %p83
    %s85 = ssub.s32 %s18, %s30
    %s86 = ssub.s32 %s19, %s26
    %s87 = sor.u32 %s85, %s86
    %p88 = scmp.eq.s32.totalorder %s87, 0
    %s90 = sadd.s32 %s89, 1
    %s91 = scalar_select %p88, %s89, %s90
    %p94 = pneg %p88
    %p95 = scmp.eq.s32.totalorder %s11, 3
    %p96 = por %p94, %p95
    %p97 = scmp.ne.s32.totalorder %s89, %s92
    %p98 = scmp.eq.s32.totalorder %s11, 0
    %p99 = por %p97, %p98
    %p100 = scmp.ne.s32.totalorder %s89, %s92
    %p101 = scmp.eq.s32.totalorder %s16, 3
    %p102 = por %p100, %p101
    %p103 = scmp.ne.s32.totalorder %s92, %s93
    %p104 = scmp.eq.s32.totalorder %s16, 0
    %p105 = por %p103, %p104
    %p106 = scmp.ne.s32.totalorder %s92, %s93
    %p107 = scmp.eq.s32.totalorder %s17, 3
    %p108 = por %p106, %p107
    %p110 = scmp.ne.s32.totalorder %s93, %s109
    %p111 = scmp.eq.s32.totalorder %s17, 0
    %p112 = por %p110, %p111
    %s114 = sadd.s32 %s113, 1
    %p117 = scmp.eq.s32.totalorder %s11, 3
    %p118 = scmp.ne.s32.totalorder %s113, %s115
    %p119 = scmp.eq.s32.totalorder %s11, 0
    %p120 = por %p118, %p119
    %p121 = scmp.ne.s32.totalorder %s113, %s115
    %p122 = scmp.eq.s32.totalorder %s16, 3
    %p123 = por %p121, %p122
    %p124 = scmp.ne.s32.totalorder %s115, %s116
    %p125 = scmp.eq.s32.totalorder %s16, 0
    %p126 = por %p124, %p125
    %p127 = scmp.ne.s32.totalorder %s115, %s116
    %p128 = scmp.eq.s32.totalorder %s17, 3
    %p129 = por %p127, %p128
    %p131 = scmp.ne.s32.totalorder %s116, %s130
    %p132 = scmp.eq.s32.totalorder %s17, 0
    %p133 = por %p131, %p132
    %s135 = sadd.s32 %s134, 1
    %p138 = scmp.eq.s32.totalorder %s11, 3
    %p139 = scmp.ne.s32.totalorder %s134, %s136
    %p140 = scmp.eq.s32.totalorder %s11, 0
    %p141 = por %p139, %p140
    %p142 = scmp.ne.s32.totalorder %s134, %s136
    %p143 = scmp.eq.s32.totalorder %s16, 3
    %p144 = por %p142, %p143
    %p145 = scmp.ne.s32.totalorder %s136, %s137
    %p146 = scmp.eq.s32.totalorder %s16, 0
    %p147 = por %p145, %p146
    %p148 = scmp.ne.s32.totalorder %s136, %s137
    %p149 = scmp.eq.s32.totalorder %s17, 3
    %p150 = por %p148, %p149
    %p152 = scmp.ne.s32.totalorder %s137, %s151
    %p153 = scmp.eq.s32.totalorder %s17, 0
    %p154 = por %p152, %p153
    %p155 = scmp.le.s32.totalorder 1, %s11
    %p156 = scmp.lt.s32.totalorder %s11, 5
    %p157 = pnand %p155, %p156
    %p158 = pneg %p157
    // Predicated region
    $region9: #{unet_innermost_forward.6} parent=5 // pred_check
      _
    $region10: #{unet_innermost_forward.6} parent=5 // pred_check_branch
      %160 = sbr.rel (%p157) target = $region12
    $region11: #{unet_innermost_forward.6} parent=5 // pred_region
      %s161 = ssub.s32 %s11, 1
    $region12: #{unet_innermost_forward.6} parent=5 // pred_fallthru
      _
    %p162 = scmp.lt.s32.totalorder %s11, 4
    // Predicated region
    $region13: #{unet_innermost_forward.6} parent=5 // pred_check
      %p163 = pneg %p162
    $region14: #{unet_innermost_forward.6} parent=5 // pred_check_branch
      %165 = sbr.rel (%p163) target = $region16
    $region15: #{unet_innermost_forward.6} parent=5 // pred_region
      // Predicated region
      $region17: #{unet_innermost_forward.6} parent=15 // pred_check
        %p166 = pneg %p45
      $region18: #{unet_innermost_forward.6} parent=15 // pred_check_branch
        %168 = sbr.rel (%p166) target = $region20
      $region19: #{unet_innermost_forward.6} parent=15 // pred_region
        %s169 = smul.u32 16, %s19
        %p170 = scmp.lt.s32.totalorder %s18, 3
        %s171 = scalar_select %p170, %s18, 3
        %p172 = scmp.lt.s32.totalorder %s169, 15
        %s173 = scalar_select %p172, %s169, 15
        %s174 = smul.addr %s171, 16
        %s175 = sadd.s32 %s173, %s174
        %s176 = smul.addr %s175, 4
        %s177 = scalar_lea.vmem %s0, %s176
        %s178 = smul.u32 16, %s19
      $region20: #{unet_innermost_forward.6} parent=15 // pred_fallthru
        _
      // Predicated region
      $region21: #{unet_innermost_forward.6} parent=15 // pred_check
        %p179 = pneg %p71
      $region22: #{unet_innermost_forward.6} parent=15 // pred_check_branch
        %181 = sbr.rel (%p179) target = $region24
      $region23: #{unet_innermost_forward.6} parent=15 // pred_region
        %p182 = scmp.lt.s32.totalorder %s18, 3
        %s183 = scalar_select %p182, %s18, 3
        %s184 = smul.addr %s183, 4
        %s185 = smul.addr %s184, 4
        %s186 = scalar_lea.vmem %s1, %s185
      $region24: #{unet_innermost_forward.6} parent=15 // pred_fallthru
        _
    $region16: #{unet_innermost_forward.6} parent=5 // pred_fallthru
      _
    %p187 = scmp.le.s32.totalorder 1, %s11
    %p188 = scmp.lt.s32.totalorder %s11, 5
    %p189 = pnand %p187, %p188
    %p190 = pneg %p189
    // Predicated region
    $region25: #{unet_innermost_forward.6} parent=5 // pred_check
      _
    $region26: #{unet_innermost_forward.6} parent=5 // pred_check_branch
      %192 = sbr.rel (%p189) target = $region28
    $region27: #{unet_innermost_forward.6} parent=5 // pred_region
      %s193 = ssub.s32 %s11, 1
      %s194 = smul.u32 16, %s21
      %p195 = scmp.lt.s32.totalorder %s20, 3
      %s196 = scalar_select %p195, %s20, 3
      %p197 = scmp.lt.s32.totalorder %s194, 15
      %s198 = scalar_select %p197, %s194, 15
      %s199 = smul.addr %s196, 16
      %s200 = sadd.s32 %s198, %s199
      %s201 = smul.addr %s200, 4
      %s202 = scalar_lea.vmem %s0, %s201
      %p203 = pneg %p51
      %p204 = pneg %p48
      %p205 = scmp.lt.s32.totalorder %s20, 3
      %s206 = scalar_select %p205, %s20, 3
      %s207 = smul.addr %s206, 4
      %s208 = smul.addr %s207, 4
      %s209 = scalar_lea.vmem %s1, %s208
      %p210 = pneg %p77
      %p211 = pneg %p74
      %p212 = pneg %p105
      %p213 = pneg %p102
      %s214 = smul.u32 16, %s21
      %p215 = scmp.lt.s32.totalorder %s20, 3
      %s216 = scalar_select %p215, %s20, 3
      %p217 = scmp.lt.s32.totalorder %s214, 15
      %s218 = scalar_select %p217, %s214, 15
      %s219 = smul.addr %s216, 16
      %s220 = sadd.s32 %s218, %s219
      %s221 = smul.addr %s220, 8
      %s222 = scalar_lea.vmem %s2, %s221
      %p223 = pneg %p126
      %p224 = pneg %p123
      %p225 = pneg %p147
      %p226 = pneg %p144
      %s227 = smul.u32 16, %s21
      %p228 = scmp.lt.s32.totalorder %s20, 3
      %s229 = scalar_select %p228, %s20, 3
      %p230 = scmp.lt.s32.totalorder %s227, 15
      %s231 = scalar_select %p230, %s227, 15
      %s232 = smul.addr %s229, 16
      %s233 = sadd.s32 %s231, %s232
      %s234 = smul.addr %s233, 4
      %s235 = scalar_lea.vmem %s0, %s234
      %s236 = smul.u32 16, %s21
      %p237 = scmp.lt.s32.totalorder %s20, 3
      %s238 = scalar_select %p237, %s20, 3
      %s239 = smul.addr %s238, 4
      %s240 = smul.addr %s239, 4
      %s241 = scalar_lea.vmem %s1, %s240
      %s242 = smul.u32 16, %s21
      %p243 = scmp.lt.s32.totalorder %s20, 3
      %s244 = scalar_select %p243, %s20, 3
      %p245 = scmp.lt.s32.totalorder %s242, 15
      %s246 = scalar_select %p245, %s242, 15
      %s247 = smul.addr %s244, 16
      %s248 = sadd.s32 %s246, %s247
      %s249 = smul.addr %s248, 8
      %s250 = scalar_lea.vmem %s2, %s249
      %s251 = smul.u32 16, %s21
      %p253 = scmp.eq.s32.totalorder %s20, 0
      %p254 = scmp.eq.s32.totalorder %s21, 0
      %p255 = pnand %p253, %p254
      %p256 = pneg %p255
      // Predicated region
      $region29: #{unet_innermost_forward.6} parent=27 // pred_check
        _
      $region30: #{unet_innermost_forward.6} parent=27 // pred_check_branch
        %258 = sbr.rel (%p255) target = $region32
      $region31: #{unet_innermost_forward.6} parent=27 // pred_region
        %vm259 = vcmask 24576
        %260 = vst.msk [vmem:[%s3] sm:$0x1] %vm259, 0.0
        %261 = vst.msk [vmem:[%s4] sm:$0x1] %vm259, 0.0
      $region32: #{unet_innermost_forward.6} parent=27 // pred_fallthru
        _
      %v262 = vld [vmem:[%s235] sm:$0xf]
      %v263 = vld [vmem:[%s235 + $0x4] sm:$0xf]
      %v264 = vld [vmem:[%s235 + $0x8] sm:$0xf]
      %v265 = vld [vmem:[%s235 + $0xc] sm:$0xf]
      %v266 = vld [vmem:[%s235 + $0x10] sm:$0xf]
      %v267 = vld [vmem:[%s235 + $0x14] sm:$0xf]
      %v268 = vld [vmem:[%s235 + $0x18] sm:$0xf]
      %v269 = vld [vmem:[%s235 + $0x1c] sm:$0xf]
      %v270 = vld [vmem:[%s235 + $0x20] sm:$0xf]
      %v271 = vld [vmem:[%s235 + $0x24] sm:$0xf]
      %v272 = vld [vmem:[%s235 + $0x28] sm:$0xf]
      %v273 = vld [vmem:[%s235 + $0x2c] sm:$0xf]
      %v274 = vld [vmem:[%s235 + $0x30] sm:$0xf]
      %v275 = vld [vmem:[%s235 + $0x34] sm:$0xf]
      %v276 = vld [vmem:[%s235 + $0x38] sm:$0xf]
      %v277 = vld [vmem:[%s235 + $0x3c] sm:$0xf]
      %v278 = vld [vmem:[%s241] sm:$0xf]
      %v279 = vld [vmem:[%s241 + $0x4] sm:$0xf]
      %v280 = vld [vmem:[%s241 + $0x8] sm:$0xf]
      %v281 = vld [vmem:[%s241 + $0xc] sm:$0xf]
      %v298 = vunpack.c.l.b16 %v262
      %v299 = vunpack.c.l.b16 %v263
      %v300 = vunpack.c.l.b16 %v264
      %v301 = vunpack.c.l.b16 %v265
      %v302 = vunpack.c.l.b16 %v266
      %v303 = vunpack.c.l.b16 %v267
      %v304 = vunpack.c.l.b16 %v268
      %v305 = vunpack.c.l.b16 %v269
      %v306 = vunpack.c.l.b16 %v270
      %v307 = vunpack.c.l.b16 %v271
      %v308 = vunpack.c.l.b16 %v272
      %v309 = vunpack.c.l.b16 %v273
      %v310 = vunpack.c.l.b16 %v274
      %v311 = vunpack.c.l.b16 %v275
      %v312 = vunpack.c.l.b16 %v276
      %v313 = vunpack.c.l.b16 %v277
      %v314 = vpack.c.b16 %v299, %v298
      %v315 = vpack.c.b16 %v301, %v300
      %v316 = vpack.c.b16 %v303, %v302
      %v317 = vpack.c.b16 %v305, %v304
      %v318 = vpack.c.b16 %v307, %v306
      %v319 = vpack.c.b16 %v309, %v308
      %v320 = vpack.c.b16 %v311, %v310
      %v321 = vpack.c.b16 %v313, %v312
      %v326 = vunpack.c.l.b16 %v278
      %v327 = vunpack.c.l.b16 %v279
      %v328 = vunpack.c.l.b16 %v280
      %v329 = vunpack.c.l.b16 %v281
      %v330 = vpack.c.b16 %v327, %v326
      %v331 = vpack.c.b16 %v329, %v328
      %vm334 = vcmask 261120
      %v336 = vsel %vm334, %v314, 0
      %v339 = vsel %vm334, %v315, 0
      %v342 = vsel %vm334, %v316, 0
      %v345 = vsel %vm334, %v317, 0
      %v348 = vsel %vm334, %v318, 0
      %v351 = vsel %vm334, %v319, 0
      %v354 = vsel %vm334, %v320, 0
      %v357 = vsel %vm334, %v321, 0
      %359 = vmatpush.bf16.msra.mxu0 0
      %360 = vmatpush.bf16.msra.mxu0 0
      %361 = vmatpush.bf16.msra.mxu0 0
      %362 = vmatpush.bf16.msra.mxu0 0
      %363 = vmatpush.bf16.msra.mxu0 0
      %364 = vmatpush.bf16.msra.mxu0 0
      %365 = vmatpush.bf16.msra.mxu0 %v331
      %366 = vmatpush.bf16.msra.mxu0 %v330
      %367 = vmatmul.bf16.gmra.mxu0 %v336
      %v368 = vpop.f32.mrf.mxu0
      %v369 = vadd.f32 0.0, %v368
      %v370 = vpop.f32.mrf.mxu0
      %v371 = vadd.f32 0.0, %v370
      %372 = vmatmul.bf16.gmra.mxu0 %v339
      %v373 = vpop.f32.mrf.mxu0
      %v374 = vadd.f32 0.0, %v373
      %v375 = vpop.f32.mrf.mxu0
      %v376 = vadd.f32 0.0, %v375
      %377 = vmatmul.bf16.gmra.mxu0 %v342
      %v378 = vpop.f32.mrf.mxu0
      %v379 = vadd.f32 0.0, %v378
      %v380 = vpop.f32.mrf.mxu0
      %v381 = vadd.f32 0.0, %v380
      %382 = vmatmul.bf16.gmra.mxu0 %v345
      %v383 = vpop.f32.mrf.mxu0
      %v384 = vadd.f32 0.0, %v383
      %v385 = vpop.f32.mrf.mxu0
      %v386 = vadd.f32 0.0, %v385
      %387 = vmatmul.bf16.gmra.mxu0 %v348
      %v388 = vpop.f32.mrf.mxu0
      %v389 = vadd.f32 0.0, %v388
      %v390 = vpop.f32.mrf.mxu0
      %v391 = vadd.f32 0.0, %v390
      %392 = vmatmul.bf16.gmra.mxu0 %v351
      %v393 = vpop.f32.mrf.mxu0
      %v394 = vadd.f32 0.0, %v393
      %v395 = vpop.f32.mrf.mxu0
      %v396 = vadd.f32 0.0, %v395
      %397 = vmatmul.bf16.gmra.mxu0 %v354
      %v398 = vpop.f32.mrf.mxu0
      %v399 = vadd.f32 0.0, %v398
      %v400 = vpop.f32.mrf.mxu0
      %v401 = vadd.f32 0.0, %v400
      %402 = vmatmul.bf16.gmra.mxu0 %v357
      %v403 = vpop.f32.mrf.mxu0
      %v404 = vadd.f32 0.0, %v403
      %v405 = vpop.f32.mrf.mxu0
      %v406 = vadd.f32 0.0, %v405
      %407 = vdwg.mxu0
      %vm408 = vcmask 31744
      %409 = vst.msk [vmem:[%s250] sm:$0xff] %vm408, %v369
      %410 = vst.msk [vmem:[%s250 + $0x8] sm:$0xff] %vm408, %v371
      %411 = vst.msk [vmem:[%s250 + $0x10] sm:$0xff] %vm408, %v374
      %412 = vst.msk [vmem:[%s250 + $0x18] sm:$0xff] %vm408, %v376
      %413 = vst.msk [vmem:[%s250 + $0x20] sm:$0xff] %vm408, %v379
      %414 = vst.msk [vmem:[%s250 + $0x28] sm:$0xff] %vm408, %v381
      %415 = vst.msk [vmem:[%s250 + $0x30] sm:$0xff] %vm408, %v384
      %416 = vst.msk [vmem:[%s250 + $0x38] sm:$0xff] %vm408, %v386
      %417 = vst.msk [vmem:[%s250 + $0x40] sm:$0xff] %vm408, %v389
      %418 = vst.msk [vmem:[%s250 + $0x48] sm:$0xff] %vm408, %v391
      %419 = vst.msk [vmem:[%s250 + $0x50] sm:$0xff] %vm408, %v394
      %420 = vst.msk [vmem:[%s250 + $0x58] sm:$0xff] %vm408, %v396
      %421 = vst.msk [vmem:[%s250 + $0x60] sm:$0xff] %vm408, %v399
      %422 = vst.msk [vmem:[%s250 + $0x68] sm:$0xff] %vm408, %v401
      %423 = vst.msk [vmem:[%s250 + $0x70] sm:$0xff] %vm408, %v404
      %424 = vst.msk [vmem:[%s250 + $0x78] sm:$0xff] %vm408, %v406
      %v425 = vld [vmem:[%s3] sm:$0x1]
      %v426 = vsel %vm408, %v369, 0.0
      %v427 = vsel %vm408, %v371, 0.0
      %v428 = vadd.f32 %v426, %v427
      %v429 = vsel %vm408, %v374, 0.0
      %v430 = vadd.f32 %v428, %v429
      %v431 = vsel %vm408, %v376, 0.0
      %v432 = vadd.f32 %v430, %v431
      %v433 = vsel %vm408, %v379, 0.0
      %v434 = vadd.f32 %v432, %v433
      %v435 = vsel %vm408, %v381, 0.0
      %v436 = vadd.f32 %v434, %v435
      %v437 = vsel %vm408, %v384, 0.0
      %v438 = vadd.f32 %v436, %v437
      %v439 = vsel %vm408, %v386, 0.0
      %v440 = vadd.f32 %v438, %v439
      %v441 = vsel %vm408, %v389, 0.0
      %v442 = vadd.f32 %v440, %v441
      %v443 = vsel %vm408, %v391, 0.0
      %v444 = vadd.f32 %v442, %v443
      %v445 = vsel %vm408, %v394, 0.0
      %v446 = vadd.f32 %v444, %v445
      %v447 = vsel %vm408, %v396, 0.0
      %v448 = vadd.f32 %v446, %v447
      %v449 = vsel %vm408, %v399, 0.0
      %v450 = vadd.f32 %v448, %v449
      %v451 = vsel %vm408, %v401, 0.0
      %v452 = vadd.f32 %v450, %v451
      %v453 = vsel %vm408, %v404, 0.0
      %v454 = vadd.f32 %v452, %v453
      %v455 = vsel %vm408, %v406, 0.0
      %v456 = vadd.f32 %v454, %v455
      %v457 = vrot.slane %v456, 4
      %v458 = vadd.f32 %v456, %v457
      %v459 = vrot.slane %v458, 2
      %v460 = vadd.f32 %v458, %v459
      %v461 = vrot.slane %v460, 1
      %v462 = vadd.f32 %v460, %v461
      %v463 = vadd.f32 %v425, %v462
      %vm464 = vcmask 24576
      %465 = vst.msk [vmem:[%s3] sm:$0x1] %vm464, %v463
      %v466 = vld [vmem:[%s4] sm:$0x1]
      %v467 = vmul.f32 %v369, %v369
      %v468 = vmul.f32 %v371, %v371
      %v469 = vmul.f32 %v374, %v374
      %v470 = vmul.f32 %v376, %v376
      %v471 = vmul.f32 %v379, %v379
      %v472 = vmul.f32 %v381, %v381
      %v473 = vmul.f32 %v384, %v384
      %v474 = vmul.f32 %v386, %v386
      %v475 = vmul.f32 %v389, %v389
      %v476 = vmul.f32 %v391, %v391
      %v477 = vmul.f32 %v394, %v394
      %v478 = vmul.f32 %v396, %v396
      %v479 = vmul.f32 %v399, %v399
      %v480 = vmul.f32 %v401, %v401
      %v481 = vmul.f32 %v404, %v404
      %v482 = vmul.f32 %v406, %v406
      %v483 = vsel %vm408, %v467, 0.0
      %v484 = vsel %vm408, %v468, 0.0
      %v485 = vadd.f32 %v483, %v484
      %v486 = vsel %vm408, %v469, 0.0
      %v487 = vadd.f32 %v485, %v486
      %v488 = vsel %vm408, %v470, 0.0
      %v489 = vadd.f32 %v487, %v488
      %v490 = vsel %vm408, %v471, 0.0
      %v491 = vadd.f32 %v489, %v490
      %v492 = vsel %vm408, %v472, 0.0
      %v493 = vadd.f32 %v491, %v492
      %v494 = vsel %vm408, %v473, 0.0
      %v495 = vadd.f32 %v493, %v494
      %v496 = vsel %vm408, %v474, 0.0
      %v497 = vadd.f32 %v495, %v496
      %v498 = vsel %vm408, %v475, 0.0
      %v499 = vadd.f32 %v497, %v498
      %v500 = vsel %vm408, %v476, 0.0
      %v501 = vadd.f32 %v499, %v500
      %v502 = vsel %vm408, %v477, 0.0
      %v503 = vadd.f32 %v501, %v502
      %v504 = vsel %vm408, %v478, 0.0
      %v505 = vadd.f32 %v503, %v504
      %v506 = vsel %vm408, %v479, 0.0
      %v507 = vadd.f32 %v505, %v506
      %v508 = vsel %vm408, %v480, 0.0
      %v509 = vadd.f32 %v507, %v508
      %v510 = vsel %vm408, %v481, 0.0
      %v511 = vadd.f32 %v509, %v510
      %v512 = vsel %vm408, %v482, 0.0
      %v513 = vadd.f32 %v511, %v512
      %v514 = vrot.slane %v513, 4
      %v515 = vadd.f32 %v513, %v514
      %v516 = vrot.slane %v515, 2
      %v517 = vadd.f32 %v515, %v516
      %v518 = vrot.slane %v517, 1
      %v519 = vadd.f32 %v517, %v518
      %v520 = vadd.f32 %v466, %v519
      %521 = vst.msk [vmem:[%s4] sm:$0x1] %vm464, %v520
      %s522 = smul.u32 16, %s21
      %p523 = scmp.lt.s32.totalorder %s20, 3
      %s524 = scalar_select %p523, %s20, 3
      %p525 = scmp.lt.s32.totalorder %s522, 15
      %s526 = scalar_select %p525, %s522, 15
      %s527 = smul.addr %s524, 16
      %s528 = sadd.s32 %s526, %s527
      %s529 = smul.addr %s528, 8
      %s530 = scalar_lea.vmem %s2, %s529
      // Predicated region
      $region33: #{unet_innermost_forward.6} parent=27 // pred_check
        %p531 = pneg %p102
      $region34: #{unet_innermost_forward.6} parent=27 // pred_check_branch
        %533 = sbr.rel (%p531) target = $region36
      $region35: #{unet_innermost_forward.6} parent=27 // pred_region
        %s534 = smul.u32 16, %s21
      $region36: #{unet_innermost_forward.6} parent=27 // pred_fallthru
        _
      // Predicated region
      $region37: #{unet_innermost_forward.6} parent=27 // pred_check
        %p535 = pneg %p123
      $region38: #{unet_innermost_forward.6} parent=27 // pred_check_branch
        %537 = sbr.rel (%p535) target = $region40
      $region39: #{unet_innermost_forward.6} parent=27 // pred_region
        _
      $region40: #{unet_innermost_forward.6} parent=27 // pred_fallthru
        _
      // Predicated region
      $region41: #{unet_innermost_forward.6} parent=27 // pred_check
        %p538 = pneg %p144
      $region42: #{unet_innermost_forward.6} parent=27 // pred_check_branch
        %540 = sbr.rel (%p538) target = $region44
      $region43: #{unet_innermost_forward.6} parent=27 // pred_region
        _
      $region44: #{unet_innermost_forward.6} parent=27 // pred_fallthru
        _
      // Predicated region
      $region45: #{unet_innermost_forward.6} parent=27 // pred_check
        %p541 = pneg %p123
      $region46: #{unet_innermost_forward.6} parent=27 // pred_check_branch
        %543 = sbr.rel (%p541) target = $region48
      $region47: #{unet_innermost_forward.6} parent=27 // pred_region
        _
      $region48: #{unet_innermost_forward.6} parent=27 // pred_fallthru
        _
      // Predicated region
      $region49: #{unet_innermost_forward.6} parent=27 // pred_check
        %p544 = pneg %p144
      $region50: #{unet_innermost_forward.6} parent=27 // pred_check_branch
        %546 = sbr.rel (%p544) target = $region52
      $region51: #{unet_innermost_forward.6} parent=27 // pred_region
        _
      $region52: #{unet_innermost_forward.6} parent=27 // pred_fallthru
        _
    $region28: #{unet_innermost_forward.6} parent=5 // pred_fallthru
      _
    %p547 = scmp.le.s32.totalorder 2, %s11
    // Predicated region
    $region53: #{unet_innermost_forward.6} parent=5 // pred_check
      %p548 = pneg %p547
    $region54: #{unet_innermost_forward.6} parent=5 // pred_check_branch
      %550 = sbr.rel (%p548) target = $region56
    $region55: #{unet_innermost_forward.6} parent=5 // pred_region
      %s551 = ssub.s32 %s11, 2
      // Predicated region
      $region57: #{unet_innermost_forward.6} parent=55 // pred_check
        %p552 = pneg %p108
      $region58: #{unet_innermost_forward.6} parent=55 // pred_check_branch
        %554 = sbr.rel (%p552) target = $region60
      $region59: #{unet_innermost_forward.6} parent=55 // pred_region
        %s555 = smul.u32 16, %s23
        %p556 = scmp.lt.s32.totalorder %s22, 3
        %s557 = scalar_select %p556, %s22, 3
        %p558 = scmp.lt.s32.totalorder %s555, 15
        %s559 = scalar_select %p558, %s555, 15
        %s560 = smul.addr %s557, 16
        %s561 = sadd.s32 %s559, %s560
        %s562 = smul.addr %s561, 8
        %s563 = scalar_lea.vmem %s2, %s562
      $region60: #{unet_innermost_forward.6} parent=55 // pred_fallthru
        _
    $region56: #{unet_innermost_forward.6} parent=5 // pred_fallthru
      _
  $region6: #{unet_innermost_forward.6} parent=0 // loop_footer
    %s15 = sadd.s32 1, %s11
  $region7: #{unet_innermost_forward.6} parent=0 // loop_footer_branch
    %10 = sbr.rel target = $region3
  $region8: #{unet_innermost_forward.6} parent=0 // loop_exit
    _

</llo_original>
